<compile_context>
chip_gen: v7x
topology: tpu7x:2x2x1
jax: 0.10.0
libtpu: 0.0.40
codegen_flags: <defaults>
</compile_context>

<pallas_src>
import jax
import jax.numpy as jnp
from jax.experimental import pallas as pl
from jax.experimental.pallas import tpu as pltpu

LANE = 128  # TPU lane width: node dim is padded to a multiple of this.


def _round_up(v, m):
    return ((v + m - 1) // m) * m


# ----------------------------- Pallas kernel --------------------------------
def encoder_kernel(at_ref, xt_ref, w1t_ref, b1_ref, w2t_ref, b2_ref, o_ref):
    """G graphs per grid step, everything in transposed (feature-major) layout.

      at_ref : (G, Np, Np)  bf16   A_norm^T (== A_norm: symmetric GCN norm), zero-padded
      xt_ref : (G, Fin, Np) bf16   X^T  (features on sublanes, nodes on lanes)
      w1t_ref: (Hid, Fin)   bf16   W1^T          b1_ref: (Hid, 1) f32
      w2t_ref: (Out, Hid)   bf16   W2^T          b2_ref: (Out, 1) f32
      o_ref  : (G, Out, Np) f32    H2^T  (lane-dense, no feature padding)
    """
    g_per_step = at_ref.shape[0]

    w1t = w1t_ref[...]
    b1 = b1_ref[...]
    w2t = w2t_ref[...]
    b2 = b2_ref[...]

    # Static unroll over the G graphs in this block (G is small, <= 8).
    # Per-graph 2-D slices keep every jnp.dot a plain MXU matmul (no silent
    # batched-contraction semantics).
    for g in range(g_per_step):
        a_t = at_ref[g]                                 # (Np, Np)  bf16
        x_t = xt_ref[g]                                 # (Fin, Np) bf16

        # Layer 1:  H1^T = relu( W1^T (X^T A^T) + b1^T )   [ == relu(A X W1 + b1)^T ]
        xa = jnp.dot(x_t, a_t,
                     preferred_element_type=jnp.float32)          # (Fin, Np) f32
        h1 = jnp.dot(w1t, xa.astype(jnp.bfloat16),
                     preferred_element_type=jnp.float32) + b1     # (Hid, Np) f32
        h1 = jnp.maximum(h1, 0.0)                                 # ReLU on VPU (f32)

        # Layer 2:  H2^T = relu( (W2^T H1^T) A^T + b2^T )  [ == relu(A (H1 W2) + b2)^T ]
        hw = jnp.dot(w2t, h1.astype(jnp.bfloat16),
                     preferred_element_type=jnp.float32)          # (Out, Np) f32
        h2 = jnp.dot(hw.astype(jnp.bfloat16), a_t,
                     preferred_element_type=jnp.float32) + b2     # (Out, Np) f32

        o_ref[g] = jnp.maximum(h2, 0.0)                 # lane-dense (Out, Np) store


# --------------------------- one-time preprocessing --------------------------
def preprocess_inputs(a_norm, x):
    """One-time graph preprocessing (NOT part of the per-forward path):
    node-dim zero-pad, bf16 cast, and transpose to the kernel's
    nodes-on-lanes layout.  Zero padding is exact: padded adjacency rows/cols
    contribute nothing to real output rows."""
    B, N, _ = a_norm.shape
    n_p = _round_up(N, LANE)
    # A_norm^T; for symmetric GCN normalization this equals A_norm (no-op data-wise).
    a_t = jnp.swapaxes(a_norm, -1, -2)
    a_t = jnp.pad(a_t, ((0, 0), (0, n_p - N), (0, n_p - N))).astype(jnp.bfloat16)
    # X^T: (B, Fin, Np) — feature dim stays UNPADDED (full-extent block dim).
    x_t = jnp.swapaxes(x, -1, -2)
    x_t = jnp.pad(x_t, ((0, 0), (0, 0), (0, n_p - N))).astype(jnp.bfloat16)
    return a_t, x_t, N


def prepare_params(w1, b1, w2, b2):
    """One-time parameter prep: transpose + bf16 cast for the MXU, column biases."""
    w1t = jnp.transpose(w1).astype(jnp.bfloat16)           # (Hid, Fin)
    w2t = jnp.transpose(w2).astype(jnp.bfloat16)           # (Out, Hid)
    b1c = jnp.reshape(b1, (-1, 1)).astype(jnp.float32)     # (Hid, 1)
    b2c = jnp.reshape(b2, (-1, 1)).astype(jnp.float32)     # (Out, 1)
    return w1t, b1c, w2t, b2c


# ----------------------------- host wrapper ---------------------------------
def encoder_forward(a_t, x_t, params, n_valid):
    """Batched 2-layer GCN encoder.

    a_t    : (B, Np, Np)  bf16  pre-padded normalized adjacency (transposed)
    x_t    : (B, Fin, Np) bf16  pre-padded transposed node features
    params : (w1t, b1c, w2t, b2c) from prepare_params
    returns (B, n_valid, Out) f32
    """
    w1t, b1c, w2t, b2c = params
    B, n_p, _ = a_t.shape
    f_in = x_t.shape[1]
    hid = w1t.shape[0]
    out_ch = w2t.shape[0]

    # Graphs per grid step: coarsen to amortize per-step pipeline overhead and
    # enlarge DMAs, but keep >= 2 grid steps so v7x's two TensorCores both get
    # work via the "parallel" axis.
    g_per_step = 1
    for cand in (8, 4, 2):
        if B % cand == 0 and (B // cand) >= 2:
            g_per_step = cand
            break

    out_t = pl.pallas_call(
        encoder_kernel,
        out_shape=jax.ShapeDtypeStruct((B, out_ch, n_p), jnp.float32),
        grid=(B // g_per_step,),
        in_specs=[
            pl.BlockSpec((g_per_step, n_p, n_p), lambda b: (b, 0, 0)),   # A^T (per block of graphs)
            pl.BlockSpec((g_per_step, f_in, n_p), lambda b: (b, 0, 0)),  # X^T
            pl.BlockSpec((hid, f_in), lambda b: (0, 0)),                 # W1^T (shared)
            pl.BlockSpec((hid, 1), lambda b: (0, 0)),                    # b1   (shared)
            pl.BlockSpec((out_ch, hid), lambda b: (0, 0)),               # W2^T (shared)
            pl.BlockSpec((out_ch, 1), lambda b: (0, 0)),                 # b2   (shared)
        ],
        out_specs=pl.BlockSpec((g_per_step, out_ch, n_p), lambda b: (b, 0, 0)),
        compiler_params=pltpu.CompilerParams(
            # Graph-block axis is independent -> shard across TensorCores on v7x.
            dimension_semantics=("parallel",),
        ),
    )(a_t, x_t, w1t, b1c, w2t, b2c)

    # (B, Out, Np) -> (B, N, Out); tiny (few KiB/graph) layout plumbing.
    return jnp.transpose(out_t, (0, 2, 1))[:, :n_valid, :]


# ----------------------------- graph / params -------------------------------
def build_normalized_adjacency(key, b, n):
    """B random undirected graphs + self-loops, symmetric GCN normalization."""
    logits = jax.random.uniform(key, (b, n, n))
    adj = (logits > 0.8).astype(jnp.float32)
    adj = jnp.maximum(adj, jnp.swapaxes(adj, -1, -2))      # undirected
    eye = jnp.eye(n, dtype=jnp.float32)
    adj = adj * (1.0 - eye) + eye                          # self-loops, no dupes
    deg = jnp.sum(adj, axis=-1)
    d_inv_sqrt = 1.0 / jnp.sqrt(deg)
    return adj * d_inv_sqrt[..., :, None] * d_inv_sqrt[..., None, :]


def glorot(key, shape):
    fan_in, fan_out = shape
    limit = jnp.sqrt(6.0 / (fan_in + fan_out))
    return jax.random.uniform(key, shape, jnp.float32, -limit, limit)


def reference_forward(a_norm, x, w1, b1, w2, b2):
    """Pure-JAX reference mirroring the kernel's bf16-input / f32-accum matmuls."""
    q = lambda t: t.astype(jnp.bfloat16).astype(jnp.float32)
    ax = jnp.einsum("bij,bjf->bif", q(a_norm), q(x))
    h1 = jnp.maximum(jnp.einsum("bif,fh->bih", q(ax), q(w1)) + b1, 0.0)
    hw = jnp.einsum("bih,ho->bio", q(h1), q(w2))
    h2 = jnp.einsum("bij,bjo->bio", q(a_norm), q(hw)) + b2
    return jnp.maximum(h2, 0.0)


if __name__ == "__main__":
    # Small shapes consistent with Encoder(in_channels=16, out_channels=8, relu, k=2):
    # layer 1: 16 -> 16 (= 2*out_channels), layer 2: 16 -> 8.  Batch of 8 graphs.
    B, N = 8, 100
    IN_CH, OUT_CH = 16, 8
    HID = 2 * OUT_CH

    key = jax.random.PRNGKey(0)
    k_graph, k_x, k_w1, k_w2 = jax.random.split(key, 4)

    a_norm = build_normalized_adjacency(k_graph, B, N)          # (B, N, N)
    x = jax.random.normal(k_x, (B, N, IN_CH), jnp.float32)      # node features

    w1 = glorot(k_w1, (IN_CH, HID))
    b1 = jnp.zeros((1, HID), jnp.float32)                       # GCNConv bias init = 0
    w2 = glorot(k_w2, (HID, OUT_CH))
    b2 = jnp.zeros((1, OUT_CH), jnp.float32)

    # One-time preprocessing (outside the forward path, per perf review).
    a_t, x_t, n_valid = preprocess_inputs(a_norm, x)
    params = prepare_params(w1, b1, w2, b2)
    a_t, x_t = jax.block_until_ready(a_t), jax.block_until_ready(x_t)
    params = jax.block_until_ready(params)

    out = encoder_forward(a_t, x_t, params, n_valid)
    out = jax.block_until_ready(out)

    ref = reference_forward(a_norm, x, w1, b1, w2, b2)
    assert out.shape == (B, N, OUT_CH)
    assert jnp.allclose(out, ref, atol=2e-3, rtol=2e-3), "mismatch vs JAX reference"

    print("KERNEL_OK")
</pallas_src>

<mosaic_0001>
module attributes {stable_mosaic.version = 11 : i64} {
  func.func @encoder_kernel(%arg0: i32, %arg1: memref<4x128x128xbf16, #tpu.memory_space<vmem>>, %arg2: memref<4x16x128xbf16, #tpu.memory_space<vmem>>, %arg3: memref<16x16xbf16, #tpu.memory_space<vmem>>, %arg4: memref<16x1xf32, #tpu.memory_space<vmem>>, %arg5: memref<8x16xbf16, #tpu.memory_space<vmem>>, %arg6: memref<8x1xf32, #tpu.memory_space<vmem>>, %arg7: memref<4x8x128xf32, #tpu.memory_space<vmem>>) attributes {dimension_semantics = [#tpu.dimension_semantics<parallel>], iteration_bounds = array<i64: 2>, scalar_prefetch = 0 : i64, scratch_operands = 0 : i64, tpu.core_type = #tpu.core_type<tc>, window_params = [{transform_indices = @transform_0, window_bounds = array<i64: 4, 128, 128>}, {transform_indices = @transform_1, window_bounds = array<i64: 4, 16, 128>}, {pipeline_mode = #tpu.pipeline_mode<synchronous>, transform_indices = @transform_2, window_bounds = array<i64: 16, 16>}, {pipeline_mode = #tpu.pipeline_mode<synchronous>, transform_indices = @transform_3, window_bounds = array<i64: 16, 1>}, {pipeline_mode = #tpu.pipeline_mode<synchronous>, transform_indices = @transform_4, window_bounds = array<i64: 8, 16>}, {pipeline_mode = #tpu.pipeline_mode<synchronous>, transform_indices = @transform_5, window_bounds = array<i64: 8, 1>}, {transform_indices = @transform_6, window_bounds = array<i64: 4, 8, 128>}]} {
    %c0 = arith.constant 0 : index
    %c0_0 = arith.constant 0 : index
    %0 = vector.load %arg3[%c0, %c0_0] : memref<16x16xbf16, #tpu.memory_space<vmem>>, vector<16x16xbf16>
    %c0_1 = arith.constant 0 : index
    %c0_2 = arith.constant 0 : index
    %1 = vector.load %arg4[%c0_1, %c0_2] : memref<16x1xf32, #tpu.memory_space<vmem>>, vector<16x1xf32>
    %c0_3 = arith.constant 0 : index
    %c0_4 = arith.constant 0 : index
    %2 = vector.load %arg5[%c0_3, %c0_4] : memref<8x16xbf16, #tpu.memory_space<vmem>>, vector<8x16xbf16>
    %c0_5 = arith.constant 0 : index
    %c0_6 = arith.constant 0 : index
    %3 = vector.load %arg6[%c0_5, %c0_6] : memref<8x1xf32, #tpu.memory_space<vmem>>, vector<8x1xf32>
    %c0_7 = arith.constant 0 : index
    %c0_8 = arith.constant 0 : index
    %c0_9 = arith.constant 0 : index
    %4 = vector.load %arg1[%c0_7, %c0_8, %c0_9] : memref<4x128x128xbf16, #tpu.memory_space<vmem>>, vector<1x128x128xbf16>
    %5 = vector.shape_cast %4 : vector<1x128x128xbf16> to vector<128x128xbf16>
    %c0_10 = arith.constant 0 : index
    %c0_11 = arith.constant 0 : index
    %c0_12 = arith.constant 0 : index
    %6 = vector.load %arg2[%c0_10, %c0_11, %c0_12] : memref<4x16x128xbf16, #tpu.memory_space<vmem>>, vector<1x16x128xbf16>
    %7 = vector.shape_cast %6 : vector<1x16x128xbf16> to vector<16x128xbf16>
    %cst = arith.constant dense<0.000000e+00> : vector<16x128xf32>
    %8 = tpu.matmul %7, %5, %cst {dimension_numbers = #tpu.dot_dimension_numbers<[1], [0], [0], [1], [0, 0, 1, 1], [], []>} : vector<16x128xbf16>, vector<128x128xbf16>, vector<16x128xf32> -> vector<16x128xf32>
    %9 = arith.truncf %8 : vector<16x128xf32> to vector<16x128xbf16>
    %cst_13 = arith.constant dense<0.000000e+00> : vector<16x128xf32>
    %10 = tpu.matmul %0, %9, %cst_13 {dimension_numbers = #tpu.dot_dimension_numbers<[1], [0], [0], [1], [0, 0, 1, 1], [], []>} : vector<16x16xbf16>, vector<16x128xbf16>, vector<16x128xf32> -> vector<16x128xf32>
    %11 = vector.broadcast %1 : vector<16x1xf32> to vector<16x128xf32>
    %12 = arith.addf %10, %11 : vector<16x128xf32>
    %cst_14 = arith.constant 0.000000e+00 : f32
    %13 = vector.broadcast %cst_14 : f32 to vector<16x128xf32>
    %14 = arith.maximumf %12, %13 : vector<16x128xf32>
    %15 = arith.truncf %14 : vector<16x128xf32> to vector<16x128xbf16>
    %cst_15 = arith.constant dense<0.000000e+00> : vector<8x128xf32>
    %16 = tpu.matmul %2, %15, %cst_15 {dimension_numbers = #tpu.dot_dimension_numbers<[1], [0], [0], [1], [0, 0, 1, 1], [], []>} : vector<8x16xbf16>, vector<16x128xbf16>, vector<8x128xf32> -> vector<8x128xf32>
    %17 = arith.truncf %16 : vector<8x128xf32> to vector<8x128xbf16>
    %cst_16 = arith.constant dense<0.000000e+00> : vector<8x128xf32>
    %18 = tpu.matmul %17, %5, %cst_16 {dimension_numbers = #tpu.dot_dimension_numbers<[1], [0], [0], [1], [0, 0, 1, 1], [], []>} : vector<8x128xbf16>, vector<128x128xbf16>, vector<8x128xf32> -> vector<8x128xf32>
    %19 = vector.broadcast %3 : vector<8x1xf32> to vector<8x128xf32>
    %20 = arith.addf %18, %19 : vector<8x128xf32>
    %cst_17 = arith.constant 0.000000e+00 : f32
    %21 = vector.broadcast %cst_17 : f32 to vector<8x128xf32>
    %22 = arith.maximumf %20, %21 : vector<8x128xf32>
    %c0_18 = arith.constant 0 : index
    %c0_19 = arith.constant 0 : index
    %c0_20 = arith.constant 0 : index
    %23 = vector.load %arg7[%c0_18, %c0_19, %c0_20] : memref<4x8x128xf32, #tpu.memory_space<vmem>>, vector<1x8x128xf32>
    %24 = vector.shape_cast %23 : vector<1x8x128xf32> to vector<8x128xf32>
    %25 = vector.shape_cast %22 : vector<8x128xf32> to vector<1x8x128xf32>
    tpu.vector_store %arg7[%c0_18, %c0_19, %c0_20], %25 {strides = array<i32>} : memref<4x8x128xf32, #tpu.memory_space<vmem>>, vector<1x8x128xf32>,
    %c1 = arith.constant 1 : index
    %c0_21 = arith.constant 0 : index
    %c0_22 = arith.constant 0 : index
    %26 = vector.load %arg1[%c1, %c0_21, %c0_22] : memref<4x128x128xbf16, #tpu.memory_space<vmem>>, vector<1x128x128xbf16>
    %27 = vector.shape_cast %26 : vector<1x128x128xbf16> to vector<128x128xbf16>
    %c1_23 = arith.constant 1 : index
    %c0_24 = arith.constant 0 : index
    %c0_25 = arith.constant 0 : index
    %28 = vector.load %arg2[%c1_23, %c0_24, %c0_25] : memref<4x16x128xbf16, #tpu.memory_space<vmem>>, vector<1x16x128xbf16>
    %29 = vector.shape_cast %28 : vector<1x16x128xbf16> to vector<16x128xbf16>
    %cst_26 = arith.constant dense<0.000000e+00> : vector<16x128xf32>
    %30 = tpu.matmul %29, %27, %cst_26 {dimension_numbers = #tpu.dot_dimension_numbers<[1], [0], [0], [1], [0, 0, 1, 1], [], []>} : vector<16x128xbf16>, vector<128x128xbf16>, vector<16x128xf32> -> vector<16x128xf32>
    %31 = arith.truncf %30 : vector<16x128xf32> to vector<16x128xbf16>
    %cst_27 = arith.constant dense<0.000000e+00> : vector<16x128xf32>
    %32 = tpu.matmul %0, %31, %cst_27 {dimension_numbers = #tpu.dot_dimension_numbers<[1], [0], [0], [1], [0, 0, 1, 1], [], []>} : vector<16x16xbf16>, vector<16x128xbf16>, vector<16x128xf32> -> vector<16x128xf32>
    %33 = vector.broadcast %1 : vector<16x1xf32> to vector<16x128xf32>
    %34 = arith.addf %32, %33 : vector<16x128xf32>
    %cst_28 = arith.constant 0.000000e+00 : f32
    %35 = vector.broadcast %cst_28 : f32 to vector<16x128xf32>
    %36 = arith.maximumf %34, %35 : vector<16x128xf32>
    %37 = arith.truncf %36 : vector<16x128xf32> to vector<16x128xbf16>
    %cst_29 = arith.constant dense<0.000000e+00> : vector<8x128xf32>
    %38 = tpu.matmul %2, %37, %cst_29 {dimension_numbers = #tpu.dot_dimension_numbers<[1], [0], [0], [1], [0, 0, 1, 1], [], []>} : vector<8x16xbf16>, vector<16x128xbf16>, vector<8x128xf32> -> vector<8x128xf32>
    %39 = arith.truncf %38 : vector<8x128xf32> to vector<8x128xbf16>
    %cst_30 = arith.constant dense<0.000000e+00> : vector<8x128xf32>
    %40 = tpu.matmul %39, %27, %cst_30 {dimension_numbers = #tpu.dot_dimension_numbers<[1], [0], [0], [1], [0, 0, 1, 1], [], []>} : vector<8x128xbf16>, vector<128x128xbf16>, vector<8x128xf32> -> vector<8x128xf32>
    %41 = vector.broadcast %3 : vector<8x1xf32> to vector<8x128xf32>
    %42 = arith.addf %40, %41 : vector<8x128xf32>
    %cst_31 = arith.constant 0.000000e+00 : f32
    %43 = vector.broadcast %cst_31 : f32 to vector<8x128xf32>
    %44 = arith.maximumf %42, %43 : vector<8x128xf32>
    %c1_32 = arith.constant 1 : index
    %c0_33 = arith.constant 0 : index
    %c0_34 = arith.constant 0 : index
    %45 = vector.load %arg7[%c1_32, %c0_33, %c0_34] : memref<4x8x128xf32, #tpu.memory_space<vmem>>, vector<1x8x128xf32>
    %46 = vector.shape_cast %45 : vector<1x8x128xf32> to vector<8x128xf32>
    %47 = vector.shape_cast %44 : vector<8x128xf32> to vector<1x8x128xf32>
    tpu.vector_store %arg7[%c1_32, %c0_33, %c0_34], %47 {strides = array<i32>} : memref<4x8x128xf32, #tpu.memory_space<vmem>>, vector<1x8x128xf32>,
    %c2 = arith.constant 2 : index
    %c0_35 = arith.constant 0 : index
    %c0_36 = arith.constant 0 : index
    %48 = vector.load %arg1[%c2, %c0_35, %c0_36] : memref<4x128x128xbf16, #tpu.memory_space<vmem>>, vector<1x128x128xbf16>
    %49 = vector.shape_cast %48 : vector<1x128x128xbf16> to vector<128x128xbf16>
    %c2_37 = arith.constant 2 : index
    %c0_38 = arith.constant 0 : index
    %c0_39 = arith.constant 0 : index
    %50 = vector.load %arg2[%c2_37, %c0_38, %c0_39] : memref<4x16x128xbf16, #tpu.memory_space<vmem>>, vector<1x16x128xbf16>
    %51 = vector.shape_cast %50 : vector<1x16x128xbf16> to vector<16x128xbf16>
    %cst_40 = arith.constant dense<0.000000e+00> : vector<16x128xf32>
    %52 = tpu.matmul %51, %49, %cst_40 {dimension_numbers = #tpu.dot_dimension_numbers<[1], [0], [0], [1], [0, 0, 1, 1], [], []>} : vector<16x128xbf16>, vector<128x128xbf16>, vector<16x128xf32> -> vector<16x128xf32>
    %53 = arith.truncf %52 : vector<16x128xf32> to vector<16x128xbf16>
    %cst_41 = arith.constant dense<0.000000e+00> : vector<16x128xf32>
    %54 = tpu.matmul %0, %53, %cst_41 {dimension_numbers = #tpu.dot_dimension_numbers<[1], [0], [0], [1], [0, 0, 1, 1], [], []>} : vector<16x16xbf16>, vector<16x128xbf16>, vector<16x128xf32> -> vector<16x128xf32>
    %55 = vector.broadcast %1 : vector<16x1xf32> to vector<16x128xf32>
    %56 = arith.addf %54, %55 : vector<16x128xf32>
    %cst_42 = arith.constant 0.000000e+00 : f32
    %57 = vector.broadcast %cst_42 : f32 to vector<16x128xf32>
    %58 = arith.maximumf %56, %57 : vector<16x128xf32>
    %59 = arith.truncf %58 : vector<16x128xf32> to vector<16x128xbf16>
    %cst_43 = arith.constant dense<0.000000e+00> : vector<8x128xf32>
    %60 = tpu.matmul %2, %59, %cst_43 {dimension_numbers = #tpu.dot_dimension_numbers<[1], [0], [0], [1], [0, 0, 1, 1], [], []>} : vector<8x16xbf16>, vector<16x128xbf16>, vector<8x128xf32> -> vector<8x128xf32>
    %61 = arith.truncf %60 : vector<8x128xf32> to vector<8x128xbf16>
    %cst_44 = arith.constant dense<0.000000e+00> : vector<8x128xf32>
    %62 = tpu.matmul %61, %49, %cst_44 {dimension_numbers = #tpu.dot_dimension_numbers<[1], [0], [0], [1], [0, 0, 1, 1], [], []>} : vector<8x128xbf16>, vector<128x128xbf16>, vector<8x128xf32> -> vector<8x128xf32>
    %63 = vector.broadcast %3 : vector<8x1xf32> to vector<8x128xf32>
    %64 = arith.addf %62, %63 : vector<8x128xf32>
    %cst_45 = arith.constant 0.000000e+00 : f32
    %65 = vector.broadcast %cst_45 : f32 to vector<8x128xf32>
    %66 = arith.maximumf %64, %65 : vector<8x128xf32>
    %c2_46 = arith.constant 2 : index
    %c0_47 = arith.constant 0 : index
    %c0_48 = arith.constant 0 : index
    %67 = vector.load %arg7[%c2_46, %c0_47, %c0_48] : memref<4x8x128xf32, #tpu.memory_space<vmem>>, vector<1x8x128xf32>
    %68 = vector.shape_cast %67 : vector<1x8x128xf32> to vector<8x128xf32>
    %69 = vector.shape_cast %66 : vector<8x128xf32> to vector<1x8x128xf32>
    tpu.vector_store %arg7[%c2_46, %c0_47, %c0_48], %69 {strides = array<i32>} : memref<4x8x128xf32, #tpu.memory_space<vmem>>, vector<1x8x128xf32>,
    %c3 = arith.constant 3 : index
    %c0_49 = arith.constant 0 : index
    %c0_50 = arith.constant 0 : index
    %70 = vector.load %arg1[%c3, %c0_49, %c0_50] : memref<4x128x128xbf16, #tpu.memory_space<vmem>>, vector<1x128x128xbf16>
    %71 = vector.shape_cast %70 : vector<1x128x128xbf16> to vector<128x128xbf16>
    %c3_51 = arith.constant 3 : index
    %c0_52 = arith.constant 0 : index
    %c0_53 = arith.constant 0 : index
    %72 = vector.load %arg2[%c3_51, %c0_52, %c0_53] : memref<4x16x128xbf16, #tpu.memory_space<vmem>>, vector<1x16x128xbf16>
    %73 = vector.shape_cast %72 : vector<1x16x128xbf16> to vector<16x128xbf16>
    %cst_54 = arith.constant dense<0.000000e+00> : vector<16x128xf32>
    %74 = tpu.matmul %73, %71, %cst_54 {dimension_numbers = #tpu.dot_dimension_numbers<[1], [0], [0], [1], [0, 0, 1, 1], [], []>} : vector<16x128xbf16>, vector<128x128xbf16>, vector<16x128xf32> -> vector<16x128xf32>
    %75 = arith.truncf %74 : vector<16x128xf32> to vector<16x128xbf16>
    %cst_55 = arith.constant dense<0.000000e+00> : vector<16x128xf32>
    %76 = tpu.matmul %0, %75, %cst_55 {dimension_numbers = #tpu.dot_dimension_numbers<[1], [0], [0], [1], [0, 0, 1, 1], [], []>} : vector<16x16xbf16>, vector<16x128xbf16>, vector<16x128xf32> -> vector<16x128xf32>
    %77 = vector.broadcast %1 : vector<16x1xf32> to vector<16x128xf32>
    %78 = arith.addf %76, %77 : vector<16x128xf32>
    %cst_56 = arith.constant 0.000000e+00 : f32
    %79 = vector.broadcast %cst_56 : f32 to vector<16x128xf32>
    %80 = arith.maximumf %78, %79 : vector<16x128xf32>
    %81 = arith.truncf %80 : vector<16x128xf32> to vector<16x128xbf16>
    %cst_57 = arith.constant dense<0.000000e+00> : vector<8x128xf32>
    %82 = tpu.matmul %2, %81, %cst_57 {dimension_numbers = #tpu.dot_dimension_numbers<[1], [0], [0], [1], [0, 0, 1, 1], [], []>} : vector<8x16xbf16>, vector<16x128xbf16>, vector<8x128xf32> -> vector<8x128xf32>
    %83 = arith.truncf %82 : vector<8x128xf32> to vector<8x128xbf16>
    %cst_58 = arith.constant dense<0.000000e+00> : vector<8x128xf32>
    %84 = tpu.matmul %83, %71, %cst_58 {dimension_numbers = #tpu.dot_dimension_numbers<[1], [0], [0], [1], [0, 0, 1, 1], [], []>} : vector<8x128xbf16>, vector<128x128xbf16>, vector<8x128xf32> -> vector<8x128xf32>
    %85 = vector.broadcast %3 : vector<8x1xf32> to vector<8x128xf32>
    %86 = arith.addf %84, %85 : vector<8x128xf32>
    %cst_59 = arith.constant 0.000000e+00 : f32
    %87 = vector.broadcast %cst_59 : f32 to vector<8x128xf32>
    %88 = arith.maximumf %86, %87 : vector<8x128xf32>
    %c3_60 = arith.constant 3 : index
    %c0_61 = arith.constant 0 : index
    %c0_62 = arith.constant 0 : index
    %89 = vector.load %arg7[%c3_60, %c0_61, %c0_62] : memref<4x8x128xf32, #tpu.memory_space<vmem>>, vector<1x8x128xf32>
    %90 = vector.shape_cast %89 : vector<1x8x128xf32> to vector<8x128xf32>
    %91 = vector.shape_cast %88 : vector<8x128xf32> to vector<1x8x128xf32>
    tpu.vector_store %arg7[%c3_60, %c0_61, %c0_62], %91 {strides = array<i32>} : memref<4x8x128xf32, #tpu.memory_space<vmem>>, vector<1x8x128xf32>,
    return
  }
  func.func @transform_0(%arg0: i32) -> (i32, i32, i32) {
    %c0_i32 = arith.constant 0 : i32
    %c0_i32_0 = arith.constant 0 : i32
    %c0_i32_1 = arith.constant 0 : i32
    return %arg0, %c0_i32, %c0_i32_0 : i32, i32, i32
  }
  func.func @transform_1(%arg0: i32) -> (i32, i32, i32) {
    %c0_i32 = arith.constant 0 : i32
    %c0_i32_0 = arith.constant 0 : i32
    %c0_i32_1 = arith.constant 0 : i32
    return %arg0, %c0_i32, %c0_i32_0 : i32, i32, i32
  }
  func.func @transform_2(%arg0: i32) -> (i32, i32) {
    %c0_i32 = arith.constant 0 : i32
    %c0_i32_0 = arith.constant 0 : i32
    %c0_i32_1 = arith.constant 0 : i32
    return %c0_i32, %c0_i32_0 : i32, i32
  }
  func.func @transform_3(%arg0: i32) -> (i32, i32) {
    %c0_i32 = arith.constant 0 : i32
    %c0_i32_0 = arith.constant 0 : i32
    %c0_i32_1 = arith.constant 0 : i32
    return %c0_i32, %c0_i32_0 : i32, i32
  }
  func.func @transform_4(%arg0: i32) -> (i32, i32) {
    %c0_i32 = arith.constant 0 : i32
    %c0_i32_0 = arith.constant 0 : i32
    %c0_i32_1 = arith.constant 0 : i32
    return %c0_i32, %c0_i32_0 : i32, i32
  }
  func.func @transform_5(%arg0: i32) -> (i32, i32) {
    %c0_i32 = arith.constant 0 : i32
    %c0_i32_0 = arith.constant 0 : i32
    %c0_i32_1 = arith.constant 0 : i32
    return %c0_i32, %c0_i32_0 : i32, i32
  }
  func.func @transform_6(%arg0: i32) -> (i32, i32, i32) {
    %c0_i32 = arith.constant 0 : i32
    %c0_i32_0 = arith.constant 0 : i32
    %c0_i32_1 = arith.constant 0 : i32
    return %arg0, %c0_i32, %c0_i32_0 : i32, i32, i32
  }
}

</mosaic_0001>

<llo_original>
// kernel: tpu_custom_call.1
$region0: #{tpu_custom_call.1}
  #allocation0 [shape = 'u32[]', space=smem, size = 0x4, offset = 0x4, fixed_abs, tag = 'smem constant byte address 0x4 - core index']
  #allocation1 [shape = 'u32[144,128]{1,0:T(1,128)}', space=vmem, size = 0x12000, scoped, tag = 'internal scratch']
  %s0 = inlined_call_operand.hbm [shape: bf16[8,128,128], index: 0, kind: input, shape index: {}]
  %s1 = inlined_call_operand.hbm [shape: bf16[8,16,128], index: 1, kind: input, shape index: {}]
  %s2 = inlined_call_operand.vmem [shape: bf16[16,16], index: 2, kind: input, shape index: {}]
  %s3 = inlined_call_operand.vmem [shape: f32[16,1], index: 3, kind: input, shape index: {}]
  %s4 = inlined_call_operand.vmem [shape: bf16[8,16], index: 4, kind: input, shape index: {}]
  %s5 = inlined_call_operand.vmem [shape: f32[8,1], index: 5, kind: input, shape index: {}]
  %s6 = inlined_call_operand.hbm [shape: f32[8,8,128], index: 6, kind: output, shape index: {}]
  %s7 = sld [smem:[#allocation0]]
  $region65: #{tpu_custom_call.1} parent=0
    _
  %s9 = ssub.s32 1, %s7
  %s10 = scalar_select 0, %s9, %s7
  $region1: #{tpu_custom_call.1} parent=0
    #allocation2 [shape = 'u8[262144]{0}', space=vmem, size = 0x40000, scoped, tag = 'input window, operand 0']
    #allocation3 [shape = 's32[2]{0}', space=sflag, size = 0x8, scoped, tag = 'scoped memory for tpu_custom_call.1']
    #allocation4 [shape = 's32[2]{0}', space=sflag, size = 0x8, scoped, tag = 'scoped memory for tpu_custom_call.1']
    #allocation5 [shape = 'u8[32768]{0}', space=vmem, size = 0x8000, scoped, tag = 'input window, operand 1']
    #allocation6 [shape = 's32[2]{0}', space=sflag, size = 0x8, scoped, tag = 'scoped memory for tpu_custom_call.1']
    #allocation7 [shape = 'u8[32768]{0}', space=vmem, size = 0x8000, scoped, tag = 'output window, operand 0']
    %11 = vsyncpa [#allocation3], 0
    %s12 = scalar_lea.sflag [#allocation3], 1
    %13 = vsyncpa %s12, 0
    %14 = vsyncpa [#allocation6], 0
    %s15 = scalar_lea.sflag [#allocation6], 1
    %16 = vsyncpa %s15, 0
    %17 = vsyncpa [#allocation4], 0
    %s18 = scalar_lea.sflag [#allocation4], 1
    %19 = vsyncpa %s18, 0
    loop: start=0, step=1, limit=4
    $region2: #{tpu_custom_call.1} parent=1 // loop_pre_header
      _
    $region3: #{tpu_custom_call.1} parent=1 // loop_header
      %s21 = sphi 0, %s25
      %p22 = scmp.ge.s32.totalorder %s21, 4
      %s31 = sphi 0, %s33
      %s34 = sphi 0, %s31
      %s35 = sphi 0, %s34
      %s51 = sphi 0, %s35
      %s57 = sphi 0, %s59
      %s60 = sphi 0, %s57
      %s61 = sphi 0, %s60
      %s77 = sphi 0, %s61
      %s81 = sphi 0, %s81
      %s83 = sphi 0, %s81
      %s84 = sphi 0, %s83
      %s98 = sphi 0, %s84
      %s102 = sphi 0, %s102
      %s104 = sphi 0, %s102
      %s105 = sphi 0, %s104
      %s119 = sphi 0, %s105
      %s123 = sphi 0, %s123
      %s125 = sphi 0, %s123
      %s126 = sphi 0, %s125
      %s140 = sphi 0, %s126
      %s144 = sphi 0, %s144
      %s146 = sphi 0, %s144
      %s147 = sphi 0, %s146
      %s161 = sphi 0, %s147
      %s167 = sphi 0, %s169
      %s170 = sphi 0, %s167
      %s171 = sphi 0, %s170
      %s187 = sphi 0, %s171
    $region4: #{tpu_custom_call.1} parent=1 // loop_header_branch
      %24 = sbr.rel (%p22) target = $region8
    $region5: #{tpu_custom_call.1} parent=1 // loop_body
      %s26 = ssub.s32 %s21, 1
      %s27 = ssub.s32 %s21, 2
      %s28 = sadd.s32 %s21, 1
      %s29 = ssub.s32 %s21, %s28
      %p30 = scmp.eq.s32.totalorder %s29, 0
      %s32 = sadd.s32 %s31, 1
      %s33 = scalar_select %p30, %s31, %s32
      %p36 = pneg %p30
      %p37 = scmp.eq.s32.totalorder %s21, 1
      %p38 = por %p36, %p37
      %p39 = scmp.ne.s32.totalorder %s31, %s34
      %p40 = scmp.eq.s32.totalorder %s21, 0
      %p41 = por %p39, %p40
      %p42 = scmp.ne.s32.totalorder %s31, %s34
      %p43 = scmp.eq.s32.totalorder %s26, 1
      %p44 = por %p42, %p43
      %p45 = scmp.ne.s32.totalorder %s34, %s35
      %p46 = scmp.eq.s32.totalorder %s26, 0
      %p47 = por %p45, %p46
      %p48 = scmp.ne.s32.totalorder %s34, %s35
      %p49 = scmp.eq.s32.totalorder %s27, 1
      %p50 = por %p48, %p49
      %p52 = scmp.ne.s32.totalorder %s35, %s51
      %p53 = scmp.eq.s32.totalorder %s27, 0
      %p54 = por %p52, %p53
      %s55 = ssub.s32 %s21, %s28
      %p56 = scmp.eq.s32.totalorder %s55, 0
      %s58 = sadd.s32 %s57, 1
      %s59 = scalar_select %p56, %s57, %s58
      %p62 = pneg %p56
      %p63 = scmp.eq.s32.totalorder %s21, 1
      %p64 = por %p62, %p63
      %p65 = scmp.ne.s32.totalorder %s57, %s60
      %p66 = scmp.eq.s32.totalorder %s21, 0
      %p67 = por %p65, %p66
      %p68 = scmp.ne.s32.totalorder %s57, %s60
      %p69 = scmp.eq.s32.totalorder %s26, 1
      %p70 = por %p68, %p69
      %p71 = scmp.ne.s32.totalorder %s60, %s61
      %p72 = scmp.eq.s32.totalorder %s26, 0
      %p73 = por %p71, %p72
      %p74 = scmp.ne.s32.totalorder %s60, %s61
      %p75 = scmp.eq.s32.totalorder %s27, 1
      %p76 = por %p74, %p75
      %p78 = scmp.ne.s32.totalorder %s61, %s77
      %p79 = scmp.eq.s32.totalorder %s27, 0
      %p80 = por %p78, %p79
      %s82 = sadd.s32 %s81, 1
      %p85 = scmp.eq.s32.totalorder %s21, 1
      %p86 = scmp.ne.s32.totalorder %s81, %s83
      %p87 = scmp.eq.s32.totalorder %s21, 0
      %p88 = por %p86, %p87
      %p89 = scmp.ne.s32.totalorder %s81, %s83
      %p90 = scmp.eq.s32.totalorder %s26, 1
      %p91 = por %p89, %p90
      %p92 = scmp.ne.s32.totalorder %s83, %s84
      %p93 = scmp.eq.s32.totalorder %s26, 0
      %p94 = por %p92, %p93
      %p95 = scmp.ne.s32.totalorder %s83, %s84
      %p96 = scmp.eq.s32.totalorder %s27, 1
      %p97 = por %p95, %p96
      %p99 = scmp.ne.s32.totalorder %s84, %s98
      %p100 = scmp.eq.s32.totalorder %s27, 0
      %p101 = por %p99, %p100
      %s103 = sadd.s32 %s102, 1
      %p106 = scmp.eq.s32.totalorder %s21, 1
      %p107 = scmp.ne.s32.totalorder %s102, %s104
      %p108 = scmp.eq.s32.totalorder %s21, 0
      %p109 = por %p107, %p108
      %p110 = scmp.ne.s32.totalorder %s102, %s104
      %p111 = scmp.eq.s32.totalorder %s26, 1
      %p112 = por %p110, %p111
      %p113 = scmp.ne.s32.totalorder %s104, %s105
      %p114 = scmp.eq.s32.totalorder %s26, 0
      %p115 = por %p113, %p114
      %p116 = scmp.ne.s32.totalorder %s104, %s105
      %p117 = scmp.eq.s32.totalorder %s27, 1
      %p118 = por %p116, %p117
      %p120 = scmp.ne.s32.totalorder %s105, %s119
      %p121 = scmp.eq.s32.totalorder %s27, 0
      %p122 = por %p120, %p121
      %s124 = sadd.s32 %s123, 1
      %p127 = scmp.eq.s32.totalorder %s21, 1
      %p128 = scmp.ne.s32.totalorder %s123, %s125
      %p129 = scmp.eq.s32.totalorder %s21, 0
      %p130 = por %p128, %p129
      %p131 = scmp.ne.s32.totalorder %s123, %s125
      %p132 = scmp.eq.s32.totalorder %s26, 1
      %p133 = por %p131, %p132
      %p134 = scmp.ne.s32.totalorder %s125, %s126
      %p135 = scmp.eq.s32.totalorder %s26, 0
      %p136 = por %p134, %p135
      %p137 = scmp.ne.s32.totalorder %s125, %s126
      %p138 = scmp.eq.s32.totalorder %s27, 1
      %p139 = por %p137, %p138
      %p141 = scmp.ne.s32.totalorder %s126, %s140
      %p142 = scmp.eq.s32.totalorder %s27, 0
      %p143 = por %p141, %p142
      %s145 = sadd.s32 %s144, 1
      %p148 = scmp.eq.s32.totalorder %s21, 1
      %p149 = scmp.ne.s32.totalorder %s144, %s146
      %p150 = scmp.eq.s32.totalorder %s21, 0
      %p151 = por %p149, %p150
      %p152 = scmp.ne.s32.totalorder %s144, %s146
      %p153 = scmp.eq.s32.totalorder %s26, 1
      %p154 = por %p152, %p153
      %p155 = scmp.ne.s32.totalorder %s146, %s147
      %p156 = scmp.eq.s32.totalorder %s26, 0
      %p157 = por %p155, %p156
      %p158 = scmp.ne.s32.totalorder %s146, %s147
      %p159 = scmp.eq.s32.totalorder %s27, 1
      %p160 = por %p158, %p159
      %p162 = scmp.ne.s32.totalorder %s147, %s161
      %p163 = scmp.eq.s32.totalorder %s27, 0
      %p164 = por %p162, %p163
      %s165 = ssub.s32 %s21, %s28
      %p166 = scmp.eq.s32.totalorder %s165, 0
      %s168 = sadd.s32 %s167, 1
      %s169 = scalar_select %p166, %s167, %s168
      %p172 = pneg %p166
      %p173 = scmp.eq.s32.totalorder %s21, 1
      %p174 = por %p172, %p173
      %p175 = scmp.ne.s32.totalorder %s167, %s170
      %p176 = scmp.eq.s32.totalorder %s21, 0
      %p177 = por %p175, %p176
      %p178 = scmp.ne.s32.totalorder %s167, %s170
      %p179 = scmp.eq.s32.totalorder %s26, 1
      %p180 = por %p178, %p179
      %p181 = scmp.ne.s32.totalorder %s170, %s171
      %p182 = scmp.eq.s32.totalorder %s26, 0
      %p183 = por %p181, %p182
      %p184 = scmp.ne.s32.totalorder %s170, %s171
      %p185 = scmp.eq.s32.totalorder %s27, 1
      %p186 = por %p184, %p185
      %p188 = scmp.ne.s32.totalorder %s171, %s187
      %p189 = scmp.eq.s32.totalorder %s27, 0
      %p190 = por %p188, %p189
      %p191 = scmp.le.s32.totalorder 1, %s21
      %p192 = scmp.lt.s32.totalorder %s21, 3
      %p193 = pnand %p191, %p192
      %p194 = pneg %p193
      // Predicated region
      $region9: #{tpu_custom_call.1} parent=5 // pred_check
        _
      $region10: #{tpu_custom_call.1} parent=5 // pred_check_branch
        %196 = sbr.rel (%p193) target = $region12
      $region11: #{tpu_custom_call.1} parent=5 // pred_region
        %s197 = ssub.s32 %s21, 1
        // Predicated region
        $region13: #{tpu_custom_call.1} parent=11 // pred_check
          %p198 = pneg %p94
        $region14: #{tpu_custom_call.1} parent=11 // pred_check_branch
          %200 = sbr.rel (%p198) target = $region16
        $region15: #{tpu_custom_call.1} parent=11 // pred_region
          _
        $region16: #{tpu_custom_call.1} parent=11 // pred_fallthru
          _
        // Predicated region
        $region17: #{tpu_custom_call.1} parent=11 // pred_check
          %p201 = pneg %p115
        $region18: #{tpu_custom_call.1} parent=11 // pred_check_branch
          %203 = sbr.rel (%p201) target = $region20
        $region19: #{tpu_custom_call.1} parent=11 // pred_region
          _
        $region20: #{tpu_custom_call.1} parent=11 // pred_fallthru
          _
        // Predicated region
        $region21: #{tpu_custom_call.1} parent=11 // pred_check
          %p204 = pneg %p136
        $region22: #{tpu_custom_call.1} parent=11 // pred_check_branch
          %206 = sbr.rel (%p204) target = $region24
        $region23: #{tpu_custom_call.1} parent=11 // pred_region
          _
        $region24: #{tpu_custom_call.1} parent=11 // pred_fallthru
          _
        // Predicated region
        $region25: #{tpu_custom_call.1} parent=11 // pred_check
          %p207 = pneg %p157
        $region26: #{tpu_custom_call.1} parent=11 // pred_check_branch
          %209 = sbr.rel (%p207) target = $region28
        $region27: #{tpu_custom_call.1} parent=11 // pred_region
          _
        $region28: #{tpu_custom_call.1} parent=11 // pred_fallthru
          _
      $region12: #{tpu_custom_call.1} parent=5 // pred_fallthru
        _
      %p210 = scmp.lt.s32.totalorder %s21, 2
      // Predicated region
      $region29: #{tpu_custom_call.1} parent=5 // pred_check
        %p211 = pneg %p210
      $region30: #{tpu_custom_call.1} parent=5 // pred_check_branch
        %213 = sbr.rel (%p211) target = $region32
      $region31: #{tpu_custom_call.1} parent=5 // pred_region
        // Predicated region
        $region33: #{tpu_custom_call.1} parent=31 // pred_check
          %p214 = pneg %p41
        $region34: #{tpu_custom_call.1} parent=31 // pred_check_branch
          %216 = sbr.rel (%p214) target = $region36
        $region35: #{tpu_custom_call.1} parent=31 // pred_region
          %s217 = sand.u32 %s31, 1
          %s218 = scalar_lea.sflag [#allocation3], %s217
          %s219 = sand.u32 %s31, 1
          %s220 = smul.addr %s219, 256
          %s221 = scalar_lea.vmem [#allocation2], %s220
          %s222 = smul.u32 4, %s21
          %s224 = ssub.s32 4096, 4096
          %225 = vsyncadd %s218, %s224
          %s226 = smul.addr %s222, 16
          %s227 = smul.addr %s226, 64
          %s228 = scalar_lea.hbm %s0, %s227
          %s229 = sshll.u32 %s221, 4
          %s230 = int_to_ptr.vmem [resolvable:$true] %s229
          %235 = dma.hbm_to_vmem [thread:$0]  %s228, 4096, %s230, %s218, 64, 64, 4
        $region36: #{tpu_custom_call.1} parent=31 // pred_fallthru
          _
        // Predicated region
        $region37: #{tpu_custom_call.1} parent=31 // pred_check
          %p236 = pneg %p67
        $region38: #{tpu_custom_call.1} parent=31 // pred_check_branch
          %238 = sbr.rel (%p236) target = $region40
        $region39: #{tpu_custom_call.1} parent=31 // pred_region
          %s239 = sand.u32 %s57, 1
          %s240 = scalar_lea.sflag [#allocation6], %s239
          %s241 = sand.u32 %s57, 1
          %s242 = smul.addr %s241, 32
          %s243 = scalar_lea.vmem [#allocation5], %s242
          %s244 = smul.u32 4, %s21
          %s246 = ssub.s32 512, 512
          %247 = vsyncadd %s240, %s246
          %s248 = smul.addr %s244, 2
          %s249 = smul.addr %s248, 64
          %s250 = scalar_lea.hbm %s1, %s249
          %s251 = sshll.u32 %s243, 4
          %s252 = int_to_ptr.vmem [resolvable:$true] %s251
          %257 = dma.hbm_to_vmem [thread:$0]  %s250, 512, %s252, %s240, 64, 64, 4
        $region40: #{tpu_custom_call.1} parent=31 // pred_fallthru
          _
      $region32: #{tpu_custom_call.1} parent=5 // pred_fallthru
        _
      %p258 = scmp.le.s32.totalorder 1, %s21
      %p259 = scmp.lt.s32.totalorder %s21, 3
      %p260 = pnand %p258, %p259
      %p261 = pneg %p260
      // Predicated region
      $region41: #{tpu_custom_call.1} parent=5 // pred_check
        _
      $region42: #{tpu_custom_call.1} parent=5 // pred_check_branch
        %263 = sbr.rel (%p260) target = $region44
      $region43: #{tpu_custom_call.1} parent=5 // pred_region
        %s264 = ssub.s32 %s21, 1
        %s265 = sand.u32 %s34, 1
        %s266 = scalar_lea.sflag [#allocation3], %s265
        %s267 = sand.u32 %s34, 1
        %s268 = smul.addr %s267, 256
        %s269 = scalar_lea.vmem [#allocation2], %s268
        // Predicated region
        $region45: #{tpu_custom_call.1} parent=43 // pred_check
          %p270 = pneg %p47
        $region46: #{tpu_custom_call.1} parent=43 // pred_check_branch
          %272 = sbr.rel (%p270) target = $region48
        $region47: #{tpu_custom_call.1} parent=43 // pred_region
          %273 = dma.done %s266, 4096
        $region48: #{tpu_custom_call.1} parent=43 // pred_fallthru
          _
        %s274 = sand.u32 %s60, 1
        %s275 = scalar_lea.sflag [#allocation6], %s274
        %s276 = sand.u32 %s60, 1
        %s277 = smul.addr %s276, 32
        %s278 = scalar_lea.vmem [#allocation5], %s277
        // Predicated region
        $region49: #{tpu_custom_call.1} parent=43 // pred_check
          %p279 = pneg %p73
        $region50: #{tpu_custom_call.1} parent=43 // pred_check_branch
          %281 = sbr.rel (%p279) target = $region52
        $region51: #{tpu_custom_call.1} parent=43 // pred_region
          %282 = dma.done %s275, 512
        $region52: #{tpu_custom_call.1} parent=43 // pred_fallthru
          _
        %s283 = sand.u32 %s34, 1
        %s284 = scalar_lea.sflag [#allocation3], %s283
        %s285 = sand.u32 %s34, 1
        %s286 = smul.addr %s285, 256
        %s287 = scalar_lea.vmem [#allocation2], %s286
        %p288 = pneg %p47
        %p289 = pneg %p44
        %s290 = sand.u32 %s60, 1
        %s291 = scalar_lea.sflag [#allocation6], %s290
        %s292 = sand.u32 %s60, 1
        %s293 = smul.addr %s292, 32
        %s294 = scalar_lea.vmem [#allocation5], %s293
        %p295 = pneg %p73
        %p296 = pneg %p70
        %p297 = pneg %p94
        %p298 = pneg %p91
        %p299 = pneg %p115
        %p300 = pneg %p112
        %p301 = pneg %p136
        %p302 = pneg %p133
        %p303 = pneg %p157
        %p304 = pneg %p154
        %p305 = pneg %p183
        %p306 = pneg %p180
        %s307 = sand.u32 %s170, 1
        %s308 = scalar_lea.sflag [#allocation4], %s307
        %s309 = sand.u32 %s170, 1
        %s310 = smul.addr %s309, 32
        %s311 = scalar_lea.vmem [#allocation7], %s310
        %s312 = smul.u32 4, %s26
        %s313 = smul.u32 4, %s26
        %s314 = smul.u32 4, %s26
        %v316 = vld [vmem:[%s2] sm:$0xf]
        %v317 = vld [vmem:[%s2 + $0x4] sm:$0xf]
        %v318 = vld [vmem:[%s3] sm:$0xff]
        %v319 = vld [vmem:[%s3 + $0x8] sm:$0xff]
        %v320 = vld [vmem:[%s4] sm:$0xf]
        %v321 = vld [vmem:[%s5] sm:$0xff]
        %v322 = vld [vmem:[%s269] sm:$0xf]
        %v323 = vld [vmem:[%s269 + $0x4] sm:$0xf]
        %v324 = vld [vmem:[%s269 + $0x8] sm:$0xf]
        %v325 = vld [vmem:[%s269 + $0xc] sm:$0xf]
        %v326 = vld [vmem:[%s269 + $0x10] sm:$0xf]
        %v327 = vld [vmem:[%s269 + $0x14] sm:$0xf]
        %v328 = vld [vmem:[%s269 + $0x18] sm:$0xf]
        %v329 = vld [vmem:[%s269 + $0x1c] sm:$0xf]
        %v330 = vld [vmem:[%s269 + $0x20] sm:$0xf]
        %v331 = vld [vmem:[%s269 + $0x24] sm:$0xf]
        %v332 = vld [vmem:[%s269 + $0x28] sm:$0xf]
        %v333 = vld [vmem:[%s269 + $0x2c] sm:$0xf]
        %v334 = vld [vmem:[%s269 + $0x30] sm:$0xf]
        %v335 = vld [vmem:[%s269 + $0x34] sm:$0xf]
        %v336 = vld [vmem:[%s269 + $0x38] sm:$0xf]
        %v337 = vld [vmem:[%s269 + $0x3c] sm:$0xf]
        %v338 = vld [vmem:[%s278] sm:$0xf]
        %v339 = vld [vmem:[%s278 + $0x4] sm:$0xf]
        %v342 = vunpack.c.l.b16 %v338
        %v343 = vunpack.c.l.b16 %v339
        %v344 = vpack.c.b16 %v343, %v342
        %v362 = vunpack.c.l.b16 %v322
        %v363 = vunpack.c.l.b16 %v323
        %v364 = vunpack.c.l.b16 %v324
        %v365 = vunpack.c.l.b16 %v325
        %v366 = vunpack.c.l.b16 %v326
        %v367 = vunpack.c.l.b16 %v327
        %v368 = vunpack.c.l.b16 %v328
        %v369 = vunpack.c.l.b16 %v329
        %v370 = vunpack.c.l.b16 %v330
        %v371 = vunpack.c.l.b16 %v331
        %v372 = vunpack.c.l.b16 %v332
        %v373 = vunpack.c.l.b16 %v333
        %v374 = vunpack.c.l.b16 %v334
        %v375 = vunpack.c.l.b16 %v335
        %v376 = vunpack.c.l.b16 %v336
        %v377 = vunpack.c.l.b16 %v337
        %v378 = vpack.c.b16 %v363, %v362
        %v379 = vpack.c.b16 %v365, %v364
        %v380 = vpack.c.b16 %v367, %v366
        %v381 = vpack.c.b16 %v369, %v368
        %v382 = vpack.c.b16 %v371, %v370
        %v383 = vpack.c.b16 %v373, %v372
        %v384 = vpack.c.b16 %v375, %v374
        %v385 = vpack.c.b16 %v377, %v376
        %394 = vmatprep.subr.bf16.mxu0 0
        %395 = vmatpush1.bf16.msra.mxu0 %v378
        %396 = vmatprep.subr.bf16.mxu0 0
        %397 = vmatpush1.bf16.msra.mxu0 %v379
        %398 = vmatprep.subr.bf16.mxu0 0
        %399 = vmatpush1.bf16.msra.mxu0 %v380
        %400 = vmatprep.subr.bf16.mxu0 0
        %401 = vmatpush1.bf16.msra.mxu0 %v381
        %402 = vmatprep.subr.bf16.mxu0 0
        %403 = vmatpush1.bf16.msra.mxu0 %v382
        %404 = vmatprep.subr.bf16.mxu0 0
        %405 = vmatpush1.bf16.msra.mxu0 %v383
        %406 = vmatprep.subr.bf16.mxu0 0
        %407 = vmatpush1.bf16.msra.mxu0 %v384
        %408 = vmatprep.subr.bf16.mxu0 0
        %409 = vmatpush1.bf16.msra.mxu0 %v385
        %410 = vmatprep.subr.bf16.mxu0 0
        %411 = vmatpush1.bf16.msra.mxu0 0
        %412 = vmatprep.subr.bf16.mxu0 0
        %413 = vmatpush1.bf16.msra.mxu0 0
        %414 = vmatprep.subr.bf16.mxu0 0
        %415 = vmatpush1.bf16.msra.mxu0 0
        %416 = vmatprep.subr.bf16.mxu0 0
        %417 = vmatpush1.bf16.msra.mxu0 0
        %418 = vmatprep.subr.bf16.mxu0 0
        %419 = vmatpush1.bf16.msra.mxu0 0
        %420 = vmatprep.subr.bf16.mxu0 0
        %421 = vmatpush1.bf16.msra.mxu0 0
        %422 = vmatprep.subr.bf16.mxu0 0
        %423 = vmatpush1.bf16.msra.mxu0 0
        %424 = vmatprep.subr.bf16.mxu0 0
        %425 = vmatpush1.bf16.msra.mxu0 0
        %426 = vmatprep.mubr.bf16.mxu0 0
        %427 = vmatmul.mubr.bf16.gmra.mrb[0].mxu0 %v344
        %v428 = vpop.f32.mrb[0].mxu0
        %v429 = vadd.f32 0.0, %v428
        %v430 = vpop.f32.mrb[0].mxu0
        %v431 = vpop.f32.mrb[0].mxu0
        %v432 = vadd.f32 0.0, %v431
        %v433 = vpop.f32.mrb[0].mxu0
        %434 = vdwg.mxu0
        %v435 = vpack.c.bf16 %v432, %v429
        %437 = vset.pattern.permute.xlu0 0
        %438 = vperm.xlu0 %437, %v318
        %v439 = vpop.permute.xlu0 %438
        %442 = vset.pattern.permute.xlu0 0
        %443 = vperm.xlu0 %442, %v319
        %v444 = vpop.permute.xlu0 %443
        %v448 = vunpack.c.l.b16 %v316
        %v449 = vunpack.c.l.b16 %v317
        %v450 = vpack.c.b16 %v449, %v448
        %vm451 = vcmask 130048
        %v453 = vsel %vm451, %v450, 0
        %455 = vmatprep.subr.bf16.mxu0 0
        %456 = vmatpush1.bf16.msra.mxu0 %v435
        %457 = vmatprep.subr.bf16.mxu0 0
        %458 = vmatpush1.bf16.msra.mxu0 0
        %459 = vmatprep.subr.bf16.mxu0 0
        %460 = vmatpush1.bf16.msra.mxu0 0
        %461 = vmatprep.subr.bf16.mxu0 0
        %462 = vmatpush1.bf16.msra.mxu0 0
        %463 = vmatprep.subr.bf16.mxu0 0
        %464 = vmatpush1.bf16.msra.mxu0 0
        %465 = vmatprep.subr.bf16.mxu0 0
        %466 = vmatpush1.bf16.msra.mxu0 0
        %467 = vmatprep.subr.bf16.mxu0 0
        %468 = vmatpush1.bf16.msra.mxu0 0
        %469 = vmatprep.subr.bf16.mxu0 0
        %470 = vmatpush1.bf16.msra.mxu0 0
        %471 = vmatprep.subr.bf16.mxu0 0
        %472 = vmatpush1.bf16.msra.mxu0 0
        %473 = vmatprep.subr.bf16.mxu0 0
        %474 = vmatpush1.bf16.msra.mxu0 0
        %475 = vmatprep.subr.bf16.mxu0 0
        %476 = vmatpush1.bf16.msra.mxu0 0
        %477 = vmatprep.subr.bf16.mxu0 0
        %478 = vmatpush1.bf16.msra.mxu0 0
        %479 = vmatprep.subr.bf16.mxu0 0
        %480 = vmatpush1.bf16.msra.mxu0 0
        %481 = vmatprep.subr.bf16.mxu0 0
        %482 = vmatpush1.bf16.msra.mxu0 0
        %483 = vmatprep.subr.bf16.mxu0 0
        %484 = vmatpush1.bf16.msra.mxu0 0
        %485 = vmatprep.subr.bf16.mxu0 0
        %486 = vmatpush1.bf16.msra.mxu0 0
        %487 = vmatprep.mubr.bf16.mxu0 0
        %488 = vmatmul.mubr.bf16.gmra.mrb[0].mxu0 %v453
        %v489 = vpop.f32.mrb[0].mxu0
        %v490 = vadd.f32 %v439, %v489
        %v491 = vpop.f32.mrb[0].mxu0
        %v492 = vpop.f32.mrb[0].mxu0
        %v493 = vadd.f32 %v444, %v492
        %v494 = vpop.f32.mrb[0].mxu0
        %495 = vdwg.mxu0
        %v496 = vmax.f32 %v490, 0.0
        %v497 = vmax.f32 %v493, 0.0
        %v498 = vpack.c.bf16 %v497, %v496
        %v500 = vsel %vm451, %v320, 0
        %502 = vmatprep.subr.bf16.mxu0 0
        %503 = vmatpush1.bf16.msra.mxu0 %v498
        %504 = vmatprep.subr.bf16.mxu0 0
        %505 = vmatpush1.bf16.msra.mxu0 0
        %506 = vmatprep.subr.bf16.mxu0 0
        %507 = vmatpush1.bf16.msra.mxu0 0
        %508 = vmatprep.subr.bf16.mxu0 0
        %509 = vmatpush1.bf16.msra.mxu0 0
        %510 = vmatprep.subr.bf16.mxu0 0
        %511 = vmatpush1.bf16.msra.mxu0 0
        %512 = vmatprep.subr.bf16.mxu0 0
        %513 = vmatpush1.bf16.msra.mxu0 0
        %514 = vmatprep.subr.bf16.mxu0 0
        %515 = vmatpush1.bf16.msra.mxu0 0
        %516 = vmatprep.subr.bf16.mxu0 0
        %517 = vmatpush1.bf16.msra.mxu0 0
        %518 = vmatprep.subr.bf16.mxu0 0
        %519 = vmatpush1.bf16.msra.mxu0 0
        %520 = vmatprep.subr.bf16.mxu0 0
        %521 = vmatpush1.bf16.msra.mxu0 0
        %522 = vmatprep.subr.bf16.mxu0 0
        %523 = vmatpush1.bf16.msra.mxu0 0
        %524 = vmatprep.subr.bf16.mxu0 0
        %525 = vmatpush1.bf16.msra.mxu0 0
        %526 = vmatprep.subr.bf16.mxu0 0
        %527 = vmatpush1.bf16.msra.mxu0 0
        %528 = vmatprep.subr.bf16.mxu0 0
        %529 = vmatpush1.bf16.msra.mxu0 0
        %530 = vmatprep.subr.bf16.mxu0 0
        %531 = vmatpush1.bf16.msra.mxu0 0
        %532 = vmatprep.subr.bf16.mxu0 0
        %533 = vmatpush1.bf16.msra.mxu0 0
        %534 = vmatprep.mubr.bf16.mxu0 0
        %535 = vmatmul.mubr.bf16.gmra.mrb[0].mxu0 %v500
        %v536 = vpop.f32.mrb[0].mxu0
        %v537 = vadd.f32 0.0, %v536
        %v538 = vpop.f32.mrb[0].mxu0
        %v539 = vpop.f32.mrb[0].mxu0
        %v540 = vpop.f32.mrb[0].mxu0
        %541 = vdwg.mxu0
        %v542 = vpack.c.bf16 %v537, %v537
        %544 = vset.pattern.permute.xlu0 0
        %545 = vperm.xlu0 %544, %v321
        %v546 = vpop.permute.xlu0 %545
        %548 = vmatprep.subr.bf16.mxu0 0
        %549 = vmatpush1.bf16.msra.mxu0 %v378
        %550 = vmatprep.subr.bf16.mxu0 0
        %551 = vmatpush1.bf16.msra.mxu0 %v379
        %552 = vmatprep.subr.bf16.mxu0 0
        %553 = vmatpush1.bf16.msra.mxu0 %v380
        %554 = vmatprep.subr.bf16.mxu0 0
        %555 = vmatpush1.bf16.msra.mxu0 %v381
        %556 = vmatprep.subr.bf16.mxu0 0
        %557 = vmatpush1.bf16.msra.mxu0 %v382
        %558 = vmatprep.subr.bf16.mxu0 0
        %559 = vmatpush1.bf16.msra.mxu0 %v383
        %560 = vmatprep.subr.bf16.mxu0 0
        %561 = vmatpush1.bf16.msra.mxu0 %v384
        %562 = vmatprep.subr.bf16.mxu0 0
        %563 = vmatpush1.bf16.msra.mxu0 %v385
        %564 = vmatprep.subr.bf16.mxu0 0
        %565 = vmatpush1.bf16.msra.mxu0 0
        %566 = vmatprep.subr.bf16.mxu0 0
        %567 = vmatpush1.bf16.msra.mxu0 0
        %568 = vmatprep.subr.bf16.mxu0 0
        %569 = vmatpush1.bf16.msra.mxu0 0
        %570 = vmatprep.subr.bf16.mxu0 0
        %571 = vmatpush1.bf16.msra.mxu0 0
        %572 = vmatprep.subr.bf16.mxu0 0
        %573 = vmatpush1.bf16.msra.mxu0 0
        %574 = vmatprep.subr.bf16.mxu0 0
        %575 = vmatpush1.bf16.msra.mxu0 0
        %576 = vmatprep.subr.bf16.mxu0 0
        %577 = vmatpush1.bf16.msra.mxu0 0
        %578 = vmatprep.subr.bf16.mxu0 0
        %579 = vmatpush1.bf16.msra.mxu0 0
        %580 = vmatprep.mubr.bf16.mxu0 0
        %581 = vmatmul.mubr.bf16.gmra.mrb[0].mxu0 %v542
        %v582 = vpop.f32.mrb[0].mxu0
        %v583 = vadd.f32 %v546, %v582
        %v584 = vpop.f32.mrb[0].mxu0
        %v585 = vpop.f32.mrb[0].mxu0
        %v586 = vpop.f32.mrb[0].mxu0
        %587 = vdwg.mxu0
        %v588 = vmax.f32 %v583, 0.0
        %589 = vst [vmem:[%s311] sm:$0xff] %v588
        %s590 = scalar_lea.vmem %s269, 64 [#allocation2]
        %v591 = vld [vmem:[%s590] sm:$0xf]
        %v592 = vld [vmem:[%s590 + $0x4] sm:$0xf]
        %v593 = vld [vmem:[%s590 + $0x8] sm:$0xf]
        %v594 = vld [vmem:[%s590 + $0xc] sm:$0xf]
        %v595 = vld [vmem:[%s590 + $0x10] sm:$0xf]
        %v596 = vld [vmem:[%s590 + $0x14] sm:$0xf]
        %v597 = vld [vmem:[%s590 + $0x18] sm:$0xf]
        %v598 = vld [vmem:[%s590 + $0x1c] sm:$0xf]
        %v599 = vld [vmem:[%s590 + $0x20] sm:$0xf]
        %v600 = vld [vmem:[%s590 + $0x24] sm:$0xf]
        %v601 = vld [vmem:[%s590 + $0x28] sm:$0xf]
        %v602 = vld [vmem:[%s590 + $0x2c] sm:$0xf]
        %v603 = vld [vmem:[%s590 + $0x30] sm:$0xf]
        %v604 = vld [vmem:[%s590 + $0x34] sm:$0xf]
        %v605 = vld [vmem:[%s590 + $0x38] sm:$0xf]
        %v606 = vld [vmem:[%s590 + $0x3c] sm:$0xf]
        %s607 = scalar_lea.vmem %s278, 8 [#allocation5]
        %v608 = vld [vmem:[%s607] sm:$0xf]
        %v609 = vld [vmem:[%s607 + $0x4] sm:$0xf]
        %v612 = vunpack.c.l.b16 %v608
        %v613 = vunpack.c.l.b16 %v609
        %v614 = vpack.c.b16 %v613, %v612
        %v632 = vunpack.c.l.b16 %v591
        %v633 = vunpack.c.l.b16 %v592
        %v634 = vunpack.c.l.b16 %v593
        %v635 = vunpack.c.l.b16 %v594
        %v636 = vunpack.c.l.b16 %v595
        %v637 = vunpack.c.l.b16 %v596
        %v638 = vunpack.c.l.b16 %v597
        %v639 = vunpack.c.l.b16 %v598
        %v640 = vunpack.c.l.b16 %v599
        %v641 = vunpack.c.l.b16 %v600
        %v642 = vunpack.c.l.b16 %v601
        %v643 = vunpack.c.l.b16 %v602
        %v644 = vunpack.c.l.b16 %v603
        %v645 = vunpack.c.l.b16 %v604
        %v646 = vunpack.c.l.b16 %v605
        %v647 = vunpack.c.l.b16 %v606
        %v648 = vpack.c.b16 %v633, %v632
        %v649 = vpack.c.b16 %v635, %v634
        %v650 = vpack.c.b16 %v637, %v636
        %v651 = vpack.c.b16 %v639, %v638
        %v652 = vpack.c.b16 %v641, %v640
        %v653 = vpack.c.b16 %v643, %v642
        %v654 = vpack.c.b16 %v645, %v644
        %v655 = vpack.c.b16 %v647, %v646
        %664 = vmatprep.subr.bf16.mxu0 0
        %665 = vmatpush1.bf16.msra.mxu0 %v648
        %666 = vmatprep.subr.bf16.mxu0 0
        %667 = vmatpush1.bf16.msra.mxu0 %v649
        %668 = vmatprep.subr.bf16.mxu0 0
        %669 = vmatpush1.bf16.msra.mxu0 %v650
        %670 = vmatprep.subr.bf16.mxu0 0
        %671 = vmatpush1.bf16.msra.mxu0 %v651
        %672 = vmatprep.subr.bf16.mxu0 0
        %673 = vmatpush1.bf16.msra.mxu0 %v652
        %674 = vmatprep.subr.bf16.mxu0 0
        %675 = vmatpush1.bf16.msra.mxu0 %v653
        %676 = vmatprep.subr.bf16.mxu0 0
        %677 = vmatpush1.bf16.msra.mxu0 %v654
        %678 = vmatprep.subr.bf16.mxu0 0
        %679 = vmatpush1.bf16.msra.mxu0 %v655
        %680 = vmatprep.subr.bf16.mxu0 0
        %681 = vmatpush1.bf16.msra.mxu0 0
        %682 = vmatprep.subr.bf16.mxu0 0
        %683 = vmatpush1.bf16.msra.mxu0 0
        %684 = vmatprep.subr.bf16.mxu0 0
        %685 = vmatpush1.bf16.msra.mxu0 0
        %686 = vmatprep.subr.bf16.mxu0 0
        %687 = vmatpush1.bf16.msra.mxu0 0
        %688 = vmatprep.subr.bf16.mxu0 0
        %689 = vmatpush1.bf16.msra.mxu0 0
        %690 = vmatprep.subr.bf16.mxu0 0
        %691 = vmatpush1.bf16.msra.mxu0 0
        %692 = vmatprep.subr.bf16.mxu0 0
        %693 = vmatpush1.bf16.msra.mxu0 0
        %694 = vmatprep.subr.bf16.mxu0 0
        %695 = vmatpush1.bf16.msra.mxu0 0
        %696 = vmatprep.mubr.bf16.mxu0 0
        %697 = vmatmul.mubr.bf16.gmra.mrb[0].mxu0 %v614
        %v698 = vpop.f32.mrb[0].mxu0
        %v699 = vadd.f32 0.0, %v698
        %v700 = vpop.f32.mrb[0].mxu0
        %v701 = vpop.f32.mrb[0].mxu0
        %v702 = vadd.f32 0.0, %v701
        %v703 = vpop.f32.mrb[0].mxu0
        %704 = vdwg.mxu0
        %v705 = vpack.c.bf16 %v702, %v699
        %706 = vmatprep.subr.bf16.mxu0 0
        %707 = vmatpush1.bf16.msra.mxu0 %v705
        %708 = vmatprep.subr.bf16.mxu0 0
        %709 = vmatpush1.bf16.msra.mxu0 0
        %710 = vmatprep.subr.bf16.mxu0 0
        %711 = vmatpush1.bf16.msra.mxu0 0
        %712 = vmatprep.subr.bf16.mxu0 0
        %713 = vmatpush1.bf16.msra.mxu0 0
        %714 = vmatprep.subr.bf16.mxu0 0
        %715 = vmatpush1.bf16.msra.mxu0 0
        %716 = vmatprep.subr.bf16.mxu0 0
        %717 = vmatpush1.bf16.msra.mxu0 0
        %718 = vmatprep.subr.bf16.mxu0 0
        %719 = vmatpush1.bf16.msra.mxu0 0
        %720 = vmatprep.subr.bf16.mxu0 0
        %721 = vmatpush1.bf16.msra.mxu0 0
        %722 = vmatprep.subr.bf16.mxu0 0
        %723 = vmatpush1.bf16.msra.mxu0 0
        %724 = vmatprep.subr.bf16.mxu0 0
        %725 = vmatpush1.bf16.msra.mxu0 0
        %726 = vmatprep.subr.bf16.mxu0 0
        %727 = vmatpush1.bf16.msra.mxu0 0
        %728 = vmatprep.subr.bf16.mxu0 0
        %729 = vmatpush1.bf16.msra.mxu0 0
        %730 = vmatprep.subr.bf16.mxu0 0
        %731 = vmatpush1.bf16.msra.mxu0 0
        %732 = vmatprep.subr.bf16.mxu0 0
        %733 = vmatpush1.bf16.msra.mxu0 0
        %734 = vmatprep.subr.bf16.mxu0 0
        %735 = vmatpush1.bf16.msra.mxu0 0
        %736 = vmatprep.subr.bf16.mxu0 0
        %737 = vmatpush1.bf16.msra.mxu0 0
        %738 = vmatprep.mubr.bf16.mxu0 0
        %739 = vmatmul.mubr.bf16.gmra.mrb[0].mxu0 %v453
        %v740 = vpop.f32.mrb[0].mxu0
        %v741 = vadd.f32 %v439, %v740
        %v742 = vpop.f32.mrb[0].mxu0
        %v743 = vpop.f32.mrb[0].mxu0
        %v744 = vadd.f32 %v444, %v743
        %v745 = vpop.f32.mrb[0].mxu0
        %746 = vdwg.mxu0
        %v747 = vmax.f32 %v741, 0.0
        %v748 = vmax.f32 %v744, 0.0
        %v749 = vpack.c.bf16 %v748, %v747
        %750 = vmatprep.subr.bf16.mxu0 0
        %751 = vmatpush1.bf16.msra.mxu0 %v749
        %752 = vmatprep.subr.bf16.mxu0 0
        %753 = vmatpush1.bf16.msra.mxu0 0
        %754 = vmatprep.subr.bf16.mxu0 0
        %755 = vmatpush1.bf16.msra.mxu0 0
        %756 = vmatprep.subr.bf16.mxu0 0
        %757 = vmatpush1.bf16.msra.mxu0 0
        %758 = vmatprep.subr.bf16.mxu0 0
        %759 = vmatpush1.bf16.msra.mxu0 0
        %760 = vmatprep.subr.bf16.mxu0 0
        %761 = vmatpush1.bf16.msra.mxu0 0
        %762 = vmatprep.subr.bf16.mxu0 0
        %763 = vmatpush1.bf16.msra.mxu0 0
        %764 = vmatprep.subr.bf16.mxu0 0
        %765 = vmatpush1.bf16.msra.mxu0 0
        %766 = vmatprep.subr.bf16.mxu0 0
        %767 = vmatpush1.bf16.msra.mxu0 0
        %768 = vmatprep.subr.bf16.mxu0 0
        %769 = vmatpush1.bf16.msra.mxu0 0
        %770 = vmatprep.subr.bf16.mxu0 0
        %771 = vmatpush1.bf16.msra.mxu0 0
        %772 = vmatprep.subr.bf16.mxu0 0
        %773 = vmatpush1.bf16.msra.mxu0 0
        %774 = vmatprep.subr.bf16.mxu0 0
        %775 = vmatpush1.bf16.msra.mxu0 0
        %776 = vmatprep.subr.bf16.mxu0 0
        %777 = vmatpush1.bf16.msra.mxu0 0
        %778 = vmatprep.subr.bf16.mxu0 0
        %779 = vmatpush1.bf16.msra.mxu0 0
        %780 = vmatprep.subr.bf16.mxu0 0
        %781 = vmatpush1.bf16.msra.mxu0 0
        %782 = vmatprep.mubr.bf16.mxu0 0
        %783 = vmatmul.mubr.bf16.gmra.mrb[0].mxu0 %v500
        %v784 = vpop.f32.mrb[0].mxu0
        %v785 = vadd.f32 0.0, %v784
        %v786 = vpop.f32.mrb[0].mxu0
        %v787 = vpop.f32.mrb[0].mxu0
        %v788 = vpop.f32.mrb[0].mxu0
        %789 = vdwg.mxu0
        %v790 = vpack.c.bf16 %v785, %v785
        %791 = vmatprep.subr.bf16.mxu0 0
        %792 = vmatpush1.bf16.msra.mxu0 %v648
        %793 = vmatprep.subr.bf16.mxu0 0
        %794 = vmatpush1.bf16.msra.mxu0 %v649
        %795 = vmatprep.subr.bf16.mxu0 0
        %796 = vmatpush1.bf16.msra.mxu0 %v650
        %797 = vmatprep.subr.bf16.mxu0 0
        %798 = vmatpush1.bf16.msra.mxu0 %v651
        %799 = vmatprep.subr.bf16.mxu0 0
        %800 = vmatpush1.bf16.msra.mxu0 %v652
        %801 = vmatprep.subr.bf16.mxu0 0
        %802 = vmatpush1.bf16.msra.mxu0 %v653
        %803 = vmatprep.subr.bf16.mxu0 0
        %804 = vmatpush1.bf16.msra.mxu0 %v654
        %805 = vmatprep.subr.bf16.mxu0 0
        %806 = vmatpush1.bf16.msra.mxu0 %v655
        %807 = vmatprep.subr.bf16.mxu0 0
        %808 = vmatpush1.bf16.msra.mxu0 0
        %809 = vmatprep.subr.bf16.mxu0 0
        %810 = vmatpush1.bf16.msra.mxu0 0
        %811 = vmatprep.subr.bf16.mxu0 0
        %812 = vmatpush1.bf16.msra.mxu0 0
        %813 = vmatprep.subr.bf16.mxu0 0
        %814 = vmatpush1.bf16.msra.mxu0 0
        %815 = vmatprep.subr.bf16.mxu0 0
        %816 = vmatpush1.bf16.msra.mxu0 0
        %817 = vmatprep.subr.bf16.mxu0 0
        %818 = vmatpush1.bf16.msra.mxu0 0
        %819 = vmatprep.subr.bf16.mxu0 0
        %820 = vmatpush1.bf16.msra.mxu0 0
        %821 = vmatprep.subr.bf16.mxu0 0
        %822 = vmatpush1.bf16.msra.mxu0 0
        %823 = vmatprep.mubr.bf16.mxu0 0
        %824 = vmatmul.mubr.bf16.gmra.mrb[0].mxu0 %v790
        %v825 = vpop.f32.mrb[0].mxu0
        %v826 = vadd.f32 %v546, %v825
        %v827 = vpop.f32.mrb[0].mxu0
        %v828 = vpop.f32.mrb[0].mxu0
        %v829 = vpop.f32.mrb[0].mxu0
        %830 = vdwg.mxu0
        %v831 = vmax.f32 %v826, 0.0
        %s832 = scalar_lea.vmem %s311, 8 [#allocation7]
        %833 = vst [vmem:[%s832] sm:$0xff] %v831
        %s834 = scalar_lea.vmem %s269, 128 [#allocation2]
        %v835 = vld [vmem:[%s834] sm:$0xf]
        %v836 = vld [vmem:[%s834 + $0x4] sm:$0xf]
        %v837 = vld [vmem:[%s834 + $0x8] sm:$0xf]
        %v838 = vld [vmem:[%s834 + $0xc] sm:$0xf]
        %v839 = vld [vmem:[%s834 + $0x10] sm:$0xf]
        %v840 = vld [vmem:[%s834 + $0x14] sm:$0xf]
        %v841 = vld [vmem:[%s834 + $0x18] sm:$0xf]
        %v842 = vld [vmem:[%s834 + $0x1c] sm:$0xf]
        %v843 = vld [vmem:[%s834 + $0x20] sm:$0xf]
        %v844 = vld [vmem:[%s834 + $0x24] sm:$0xf]
        %v845 = vld [vmem:[%s834 + $0x28] sm:$0xf]
        %v846 = vld [vmem:[%s834 + $0x2c] sm:$0xf]
        %v847 = vld [vmem:[%s834 + $0x30] sm:$0xf]
        %v848 = vld [vmem:[%s834 + $0x34] sm:$0xf]
        %v849 = vld [vmem:[%s834 + $0x38] sm:$0xf]
        %v850 = vld [vmem:[%s834 + $0x3c] sm:$0xf]
        %s851 = scalar_lea.vmem %s278, 16 [#allocation5]
        %v852 = vld [vmem:[%s851] sm:$0xf]
        %v853 = vld [vmem:[%s851 + $0x4] sm:$0xf]
        %v856 = vunpack.c.l.b16 %v852
        %v857 = vunpack.c.l.b16 %v853
        %v858 = vpack.c.b16 %v857, %v856
        %v876 = vunpack.c.l.b16 %v835
        %v877 = vunpack.c.l.b16 %v836
        %v878 = vunpack.c.l.b16 %v837
        %v879 = vunpack.c.l.b16 %v838
        %v880 = vunpack.c.l.b16 %v839
        %v881 = vunpack.c.l.b16 %v840
        %v882 = vunpack.c.l.b16 %v841
        %v883 = vunpack.c.l.b16 %v842
        %v884 = vunpack.c.l.b16 %v843
        %v885 = vunpack.c.l.b16 %v844
        %v886 = vunpack.c.l.b16 %v845
        %v887 = vunpack.c.l.b16 %v846
        %v888 = vunpack.c.l.b16 %v847
        %v889 = vunpack.c.l.b16 %v848
        %v890 = vunpack.c.l.b16 %v849
        %v891 = vunpack.c.l.b16 %v850
        %v892 = vpack.c.b16 %v877, %v876
        %v893 = vpack.c.b16 %v879, %v878
        %v894 = vpack.c.b16 %v881, %v880
        %v895 = vpack.c.b16 %v883, %v882
        %v896 = vpack.c.b16 %v885, %v884
        %v897 = vpack.c.b16 %v887, %v886
        %v898 = vpack.c.b16 %v889, %v888
        %v899 = vpack.c.b16 %v891, %v890
        %908 = vmatprep.subr.bf16.mxu0 0
        %909 = vmatpush1.bf16.msra.mxu0 %v892
        %910 = vmatprep.subr.bf16.mxu0 0
        %911 = vmatpush1.bf16.msra.mxu0 %v893
        %912 = vmatprep.subr.bf16.mxu0 0
        %913 = vmatpush1.bf16.msra.mxu0 %v894
        %914 = vmatprep.subr.bf16.mxu0 0
        %915 = vmatpush1.bf16.msra.mxu0 %v895
        %916 = vmatprep.subr.bf16.mxu0 0
        %917 = vmatpush1.bf16.msra.mxu0 %v896
        %918 = vmatprep.subr.bf16.mxu0 0
        %919 = vmatpush1.bf16.msra.mxu0 %v897
        %920 = vmatprep.subr.bf16.mxu0 0
        %921 = vmatpush1.bf16.msra.mxu0 %v898
        %922 = vmatprep.subr.bf16.mxu0 0
        %923 = vmatpush1.bf16.msra.mxu0 %v899
        %924 = vmatprep.subr.bf16.mxu0 0
        %925 = vmatpush1.bf16.msra.mxu0 0
        %926 = vmatprep.subr.bf16.mxu0 0
        %927 = vmatpush1.bf16.msra.mxu0 0
        %928 = vmatprep.subr.bf16.mxu0 0
        %929 = vmatpush1.bf16.msra.mxu0 0
        %930 = vmatprep.subr.bf16.mxu0 0
        %931 = vmatpush1.bf16.msra.mxu0 0
        %932 = vmatprep.subr.bf16.mxu0 0
        %933 = vmatpush1.bf16.msra.mxu0 0
        %934 = vmatprep.subr.bf16.mxu0 0
        %935 = vmatpush1.bf16.msra.mxu0 0
        %936 = vmatprep.subr.bf16.mxu0 0
        %937 = vmatpush1.bf16.msra.mxu0 0
        %938 = vmatprep.subr.bf16.mxu0 0
        %939 = vmatpush1.bf16.msra.mxu0 0
        %940 = vmatprep.mubr.bf16.mxu0 0
        %941 = vmatmul.mubr.bf16.gmra.mrb[0].mxu0 %v858
        %v942 = vpop.f32.mrb[0].mxu0
        %v943 = vadd.f32 0.0, %v942
        %v944 = vpop.f32.mrb[0].mxu0
        %v945 = vpop.f32.mrb[0].mxu0
        %v946 = vadd.f32 0.0, %v945
        %v947 = vpop.f32.mrb[0].mxu0
        %948 = vdwg.mxu0
        %v949 = vpack.c.bf16 %v946, %v943
        %950 = vmatprep.subr.bf16.mxu0 0
        %951 = vmatpush1.bf16.msra.mxu0 %v949
        %952 = vmatprep.subr.bf16.mxu0 0
        %953 = vmatpush1.bf16.msra.mxu0 0
        %954 = vmatprep.subr.bf16.mxu0 0
        %955 = vmatpush1.bf16.msra.mxu0 0
        %956 = vmatprep.subr.bf16.mxu0 0
        %957 = vmatpush1.bf16.msra.mxu0 0
        %958 = vmatprep.subr.bf16.mxu0 0
        %959 = vmatpush1.bf16.msra.mxu0 0
        %960 = vmatprep.subr.bf16.mxu0 0
        %961 = vmatpush1.bf16.msra.mxu0 0
        %962 = vmatprep.subr.bf16.mxu0 0
        %963 = vmatpush1.bf16.msra.mxu0 0
        %964 = vmatprep.subr.bf16.mxu0 0
        %965 = vmatpush1.bf16.msra.mxu0 0
        %966 = vmatprep.subr.bf16.mxu0 0
        %967 = vmatpush1.bf16.msra.mxu0 0
        %968 = vmatprep.subr.bf16.mxu0 0
        %969 = vmatpush1.bf16.msra.mxu0 0
        %970 = vmatprep.subr.bf16.mxu0 0
        %971 = vmatpush1.bf16.msra.mxu0 0
        %972 = vmatprep.subr.bf16.mxu0 0
        %973 = vmatpush1.bf16.msra.mxu0 0
        %974 = vmatprep.subr.bf16.mxu0 0
        %975 = vmatpush1.bf16.msra.mxu0 0
        %976 = vmatprep.subr.bf16.mxu0 0
        %977 = vmatpush1.bf16.msra.mxu0 0
        %978 = vmatprep.subr.bf16.mxu0 0
        %979 = vmatpush1.bf16.msra.mxu0 0
        %980 = vmatprep.subr.bf16.mxu0 0
        %981 = vmatpush1.bf16.msra.mxu0 0
        %982 = vmatprep.mubr.bf16.mxu0 0
        %983 = vmatmul.mubr.bf16.gmra.mrb[0].mxu0 %v453
        %v984 = vpop.f32.mrb[0].mxu0
        %v985 = vadd.f32 %v439, %v984
        %v986 = vpop.f32.mrb[0].mxu0
        %v987 = vpop.f32.mrb[0].mxu0
        %v988 = vadd.f32 %v444, %v987
        %v989 = vpop.f32.mrb[0].mxu0
        %990 = vdwg.mxu0
        %v991 = vmax.f32 %v985, 0.0
        %v992 = vmax.f32 %v988, 0.0
        %v993 = vpack.c.bf16 %v992, %v991
        %994 = vmatprep.subr.bf16.mxu0 0
        %995 = vmatpush1.bf16.msra.mxu0 %v993
        %996 = vmatprep.subr.bf16.mxu0 0
        %997 = vmatpush1.bf16.msra.mxu0 0
        %998 = vmatprep.subr.bf16.mxu0 0
        %999 = vmatpush1.bf16.msra.mxu0 0
        %1000 = vmatprep.subr.bf16.mxu0 0
        %1001 = vmatpush1.bf16.msra.mxu0 0
        %1002 = vmatprep.subr.bf16.mxu0 0
        %1003 = vmatpush1.bf16.msra.mxu0 0
        %1004 = vmatprep.subr.bf16.mxu0 0
        %1005 = vmatpush1.bf16.msra.mxu0 0
        %1006 = vmatprep.subr.bf16.mxu0 0
        %1007 = vmatpush1.bf16.msra.mxu0 0
        %1008 = vmatprep.subr.bf16.mxu0 0
        %1009 = vmatpush1.bf16.msra.mxu0 0
        %1010 = vmatprep.subr.bf16.mxu0 0
        %1011 = vmatpush1.bf16.msra.mxu0 0
        %1012 = vmatprep.subr.bf16.mxu0 0
        %1013 = vmatpush1.bf16.msra.mxu0 0
        %1014 = vmatprep.subr.bf16.mxu0 0
        %1015 = vmatpush1.bf16.msra.mxu0 0
        %1016 = vmatprep.subr.bf16.mxu0 0
        %1017 = vmatpush1.bf16.msra.mxu0 0
        %1018 = vmatprep.subr.bf16.mxu0 0
        %1019 = vmatpush1.bf16.msra.mxu0 0
        %1020 = vmatprep.subr.bf16.mxu0 0
        %1021 = vmatpush1.bf16.msra.mxu0 0
        %1022 = vmatprep.subr.bf16.mxu0 0
        %1023 = vmatpush1.bf16.msra.mxu0 0
        %1024 = vmatprep.subr.bf16.mxu0 0
        %1025 = vmatpush1.bf16.msra.mxu0 0
        %1026 = vmatprep.mubr.bf16.mxu0 0
        %1027 = vmatmul.mubr.bf16.gmra.mrb[0].mxu0 %v500
        %v1028 = vpop.f32.mrb[0].mxu0
        %v1029 = vadd.f32 0.0, %v1028
        %v1030 = vpop.f32.mrb[0].mxu0
        %v1031 = vpop.f32.mrb[0].mxu0
        %v1032 = vpop.f32.mrb[0].mxu0
        %1033 = vdwg.mxu0
        %v1034 = vpack.c.bf16 %v1029, %v1029
        %1035 = vmatprep.subr.bf16.mxu0 0
        %1036 = vmatpush1.bf16.msra.mxu0 %v892
        %1037 = vmatprep.subr.bf16.mxu0 0
        %1038 = vmatpush1.bf16.msra.mxu0 %v893
        %1039 = vmatprep.subr.bf16.mxu0 0
        %1040 = vmatpush1.bf16.msra.mxu0 %v894
        %1041 = vmatprep.subr.bf16.mxu0 0
        %1042 = vmatpush1.bf16.msra.mxu0 %v895
        %1043 = vmatprep.subr.bf16.mxu0 0
        %1044 = vmatpush1.bf16.msra.mxu0 %v896
        %1045 = vmatprep.subr.bf16.mxu0 0
        %1046 = vmatpush1.bf16.msra.mxu0 %v897
        %1047 = vmatprep.subr.bf16.mxu0 0
        %1048 = vmatpush1.bf16.msra.mxu0 %v898
        %1049 = vmatprep.subr.bf16.mxu0 0
        %1050 = vmatpush1.bf16.msra.mxu0 %v899
        %1051 = vmatprep.subr.bf16.mxu0 0
        %1052 = vmatpush1.bf16.msra.mxu0 0
        %1053 = vmatprep.subr.bf16.mxu0 0
        %1054 = vmatpush1.bf16.msra.mxu0 0
        %1055 = vmatprep.subr.bf16.mxu0 0
        %1056 = vmatpush1.bf16.msra.mxu0 0
        %1057 = vmatprep.subr.bf16.mxu0 0
        %1058 = vmatpush1.bf16.msra.mxu0 0
        %1059 = vmatprep.subr.bf16.mxu0 0
        %1060 = vmatpush1.bf16.msra.mxu0 0
        %1061 = vmatprep.subr.bf16.mxu0 0
        %1062 = vmatpush1.bf16.msra.mxu0 0
        %1063 = vmatprep.subr.bf16.mxu0 0
        %1064 = vmatpush1.bf16.msra.mxu0 0
        %1065 = vmatprep.subr.bf16.mxu0 0
        %1066 = vmatpush1.bf16.msra.mxu0 0
        %1067 = vmatprep.mubr.bf16.mxu0 0
        %1068 = vmatmul.mubr.bf16.gmra.mrb[0].mxu0 %v1034
        %v1069 = vpop.f32.mrb[0].mxu0
        %v1070 = vadd.f32 %v546, %v1069
        %v1071 = vpop.f32.mrb[0].mxu0
        %v1072 = vpop.f32.mrb[0].mxu0
        %v1073 = vpop.f32.mrb[0].mxu0
        %1074 = vdwg.mxu0
        %v1075 = vmax.f32 %v1070, 0.0
        %s1076 = scalar_lea.vmem %s311, 16 [#allocation7]
        %1077 = vst [vmem:[%s1076] sm:$0xff] %v1075
        %s1078 = scalar_lea.vmem %s269, 192 [#allocation2]
        %v1079 = vld [vmem:[%s1078] sm:$0xf]
        %v1080 = vld [vmem:[%s1078 + $0x4] sm:$0xf]
        %v1081 = vld [vmem:[%s1078 + $0x8] sm:$0xf]
        %v1082 = vld [vmem:[%s1078 + $0xc] sm:$0xf]
        %v1083 = vld [vmem:[%s1078 + $0x10] sm:$0xf]
        %v1084 = vld [vmem:[%s1078 + $0x14] sm:$0xf]
        %v1085 = vld [vmem:[%s1078 + $0x18] sm:$0xf]
        %v1086 = vld [vmem:[%s1078 + $0x1c] sm:$0xf]
        %v1087 = vld [vmem:[%s1078 + $0x20] sm:$0xf]
        %v1088 = vld [vmem:[%s1078 + $0x24] sm:$0xf]
        %v1089 = vld [vmem:[%s1078 + $0x28] sm:$0xf]
        %v1090 = vld [vmem:[%s1078 + $0x2c] sm:$0xf]
        %v1091 = vld [vmem:[%s1078 + $0x30] sm:$0xf]
        %v1092 = vld [vmem:[%s1078 + $0x34] sm:$0xf]
        %v1093 = vld [vmem:[%s1078 + $0x38] sm:$0xf]
        %v1094 = vld [vmem:[%s1078 + $0x3c] sm:$0xf]
        %s1095 = scalar_lea.vmem %s278, 24 [#allocation5]
        %v1096 = vld [vmem:[%s1095] sm:$0xf]
        %v1097 = vld [vmem:[%s1095 + $0x4] sm:$0xf]
        %v1100 = vunpack.c.l.b16 %v1096
        %v1101 = vunpack.c.l.b16 %v1097
        %v1102 = vpack.c.b16 %v1101, %v1100
        %v1120 = vunpack.c.l.b16 %v1079
        %v1121 = vunpack.c.l.b16 %v1080
        %v1122 = vunpack.c.l.b16 %v1081
        %v1123 = vunpack.c.l.b16 %v1082
        %v1124 = vunpack.c.l.b16 %v1083
        %v1125 = vunpack.c.l.b16 %v1084
        %v1126 = vunpack.c.l.b16 %v1085
        %v1127 = vunpack.c.l.b16 %v1086
        %v1128 = vunpack.c.l.b16 %v1087
        %v1129 = vunpack.c.l.b16 %v1088
        %v1130 = vunpack.c.l.b16 %v1089
        %v1131 = vunpack.c.l.b16 %v1090
        %v1132 = vunpack.c.l.b16 %v1091
        %v1133 = vunpack.c.l.b16 %v1092
        %v1134 = vunpack.c.l.b16 %v1093
        %v1135 = vunpack.c.l.b16 %v1094
        %v1136 = vpack.c.b16 %v1121, %v1120
        %v1137 = vpack.c.b16 %v1123, %v1122
        %v1138 = vpack.c.b16 %v1125, %v1124
        %v1139 = vpack.c.b16 %v1127, %v1126
        %v1140 = vpack.c.b16 %v1129, %v1128
        %v1141 = vpack.c.b16 %v1131, %v1130
        %v1142 = vpack.c.b16 %v1133, %v1132
        %v1143 = vpack.c.b16 %v1135, %v1134
        %1152 = vmatprep.subr.bf16.mxu0 0
        %1153 = vmatpush1.bf16.msra.mxu0 %v1136
        %1154 = vmatprep.subr.bf16.mxu0 0
        %1155 = vmatpush1.bf16.msra.mxu0 %v1137
        %1156 = vmatprep.subr.bf16.mxu0 0
        %1157 = vmatpush1.bf16.msra.mxu0 %v1138
        %1158 = vmatprep.subr.bf16.mxu0 0
        %1159 = vmatpush1.bf16.msra.mxu0 %v1139
        %1160 = vmatprep.subr.bf16.mxu0 0
        %1161 = vmatpush1.bf16.msra.mxu0 %v1140
        %1162 = vmatprep.subr.bf16.mxu0 0
        %1163 = vmatpush1.bf16.msra.mxu0 %v1141
        %1164 = vmatprep.subr.bf16.mxu0 0
        %1165 = vmatpush1.bf16.msra.mxu0 %v1142
        %1166 = vmatprep.subr.bf16.mxu0 0
        %1167 = vmatpush1.bf16.msra.mxu0 %v1143
        %1168 = vmatprep.subr.bf16.mxu0 0
        %1169 = vmatpush1.bf16.msra.mxu0 0
        %1170 = vmatprep.subr.bf16.mxu0 0
        %1171 = vmatpush1.bf16.msra.mxu0 0
        %1172 = vmatprep.subr.bf16.mxu0 0
        %1173 = vmatpush1.bf16.msra.mxu0 0
        %1174 = vmatprep.subr.bf16.mxu0 0
        %1175 = vmatpush1.bf16.msra.mxu0 0
        %1176 = vmatprep.subr.bf16.mxu0 0
        %1177 = vmatpush1.bf16.msra.mxu0 0
        %1178 = vmatprep.subr.bf16.mxu0 0
        %1179 = vmatpush1.bf16.msra.mxu0 0
        %1180 = vmatprep.subr.bf16.mxu0 0
        %1181 = vmatpush1.bf16.msra.mxu0 0
        %1182 = vmatprep.subr.bf16.mxu0 0
        %1183 = vmatpush1.bf16.msra.mxu0 0
        %1184 = vmatprep.mubr.bf16.mxu0 0
        %1185 = vmatmul.mubr.bf16.gmra.mrb[0].mxu0 %v1102
        %v1186 = vpop.f32.mrb[0].mxu0
        %v1187 = vadd.f32 0.0, %v1186
        %v1188 = vpop.f32.mrb[0].mxu0
        %v1189 = vpop.f32.mrb[0].mxu0
        %v1190 = vadd.f32 0.0, %v1189
        %v1191 = vpop.f32.mrb[0].mxu0
        %1192 = vdwg.mxu0
        %v1193 = vpack.c.bf16 %v1190, %v1187
        %1194 = vmatprep.subr.bf16.mxu0 0
        %1195 = vmatpush1.bf16.msra.mxu0 %v1193
        %1196 = vmatprep.subr.bf16.mxu0 0
        %1197 = vmatpush1.bf16.msra.mxu0 0
        %1198 = vmatprep.subr.bf16.mxu0 0
        %1199 = vmatpush1.bf16.msra.mxu0 0
        %1200 = vmatprep.subr.bf16.mxu0 0
        %1201 = vmatpush1.bf16.msra.mxu0 0
        %1202 = vmatprep.subr.bf16.mxu0 0
        %1203 = vmatpush1.bf16.msra.mxu0 0
        %1204 = vmatprep.subr.bf16.mxu0 0
        %1205 = vmatpush1.bf16.msra.mxu0 0
        %1206 = vmatprep.subr.bf16.mxu0 0
        %1207 = vmatpush1.bf16.msra.mxu0 0
        %1208 = vmatprep.subr.bf16.mxu0 0
        %1209 = vmatpush1.bf16.msra.mxu0 0
        %1210 = vmatprep.subr.bf16.mxu0 0
        %1211 = vmatpush1.bf16.msra.mxu0 0
        %1212 = vmatprep.subr.bf16.mxu0 0
        %1213 = vmatpush1.bf16.msra.mxu0 0
        %1214 = vmatprep.subr.bf16.mxu0 0
        %1215 = vmatpush1.bf16.msra.mxu0 0
        %1216 = vmatprep.subr.bf16.mxu0 0
        %1217 = vmatpush1.bf16.msra.mxu0 0
        %1218 = vmatprep.subr.bf16.mxu0 0
        %1219 = vmatpush1.bf16.msra.mxu0 0
        %1220 = vmatprep.subr.bf16.mxu0 0
        %1221 = vmatpush1.bf16.msra.mxu0 0
        %1222 = vmatprep.subr.bf16.mxu0 0
        %1223 = vmatpush1.bf16.msra.mxu0 0
        %1224 = vmatprep.subr.bf16.mxu0 0
        %1225 = vmatpush1.bf16.msra.mxu0 0
        %1226 = vmatprep.mubr.bf16.mxu0 0
        %1227 = vmatmul.mubr.bf16.gmra.mrb[0].mxu0 %v453
        %v1228 = vpop.f32.mrb[0].mxu0
        %v1229 = vadd.f32 %v439, %v1228
        %v1230 = vpop.f32.mrb[0].mxu0
        %v1231 = vpop.f32.mrb[0].mxu0
        %v1232 = vadd.f32 %v444, %v1231
        %v1233 = vpop.f32.mrb[0].mxu0
        %1234 = vdwg.mxu0
        %v1235 = vmax.f32 %v1229, 0.0
        %v1236 = vmax.f32 %v1232, 0.0
        %v1237 = vpack.c.bf16 %v1236, %v1235
        %1238 = vmatprep.subr.bf16.mxu0 0
        %1239 = vmatpush1.bf16.msra.mxu0 %v1237
        %1240 = vmatprep.subr.bf16.mxu0 0
        %1241 = vmatpush1.bf16.msra.mxu0 0
        %1242 = vmatprep.subr.bf16.mxu0 0
        %1243 = vmatpush1.bf16.msra.mxu0 0
        %1244 = vmatprep.subr.bf16.mxu0 0
        %1245 = vmatpush1.bf16.msra.mxu0 0
        %1246 = vmatprep.subr.bf16.mxu0 0
        %1247 = vmatpush1.bf16.msra.mxu0 0
        %1248 = vmatprep.subr.bf16.mxu0 0
        %1249 = vmatpush1.bf16.msra.mxu0 0
        %1250 = vmatprep.subr.bf16.mxu0 0
        %1251 = vmatpush1.bf16.msra.mxu0 0
        %1252 = vmatprep.subr.bf16.mxu0 0
        %1253 = vmatpush1.bf16.msra.mxu0 0
        %1254 = vmatprep.subr.bf16.mxu0 0
        %1255 = vmatpush1.bf16.msra.mxu0 0
        %1256 = vmatprep.subr.bf16.mxu0 0
        %1257 = vmatpush1.bf16.msra.mxu0 0
        %1258 = vmatprep.subr.bf16.mxu0 0
        %1259 = vmatpush1.bf16.msra.mxu0 0
        %1260 = vmatprep.subr.bf16.mxu0 0
        %1261 = vmatpush1.bf16.msra.mxu0 0
        %1262 = vmatprep.subr.bf16.mxu0 0
        %1263 = vmatpush1.bf16.msra.mxu0 0
        %1264 = vmatprep.subr.bf16.mxu0 0
        %1265 = vmatpush1.bf16.msra.mxu0 0
        %1266 = vmatprep.subr.bf16.mxu0 0
        %1267 = vmatpush1.bf16.msra.mxu0 0
        %1268 = vmatprep.subr.bf16.mxu0 0
        %1269 = vmatpush1.bf16.msra.mxu0 0
        %1270 = vmatprep.mubr.bf16.mxu0 0
        %1271 = vmatmul.mubr.bf16.gmra.mrb[0].mxu0 %v500
        %v1272 = vpop.f32.mrb[0].mxu0
        %v1273 = vadd.f32 0.0, %v1272
        %v1274 = vpop.f32.mrb[0].mxu0
        %v1275 = vpop.f32.mrb[0].mxu0
        %v1276 = vpop.f32.mrb[0].mxu0
        %1277 = vdwg.mxu0
        %v1278 = vpack.c.bf16 %v1273, %v1273
        %1279 = vmatprep.subr.bf16.mxu0 0
        %1280 = vmatpush1.bf16.msra.mxu0 %v1136
        %1281 = vmatprep.subr.bf16.mxu0 0
        %1282 = vmatpush1.bf16.msra.mxu0 %v1137
        %1283 = vmatprep.subr.bf16.mxu0 0
        %1284 = vmatpush1.bf16.msra.mxu0 %v1138
        %1285 = vmatprep.subr.bf16.mxu0 0
        %1286 = vmatpush1.bf16.msra.mxu0 %v1139
        %1287 = vmatprep.subr.bf16.mxu0 0
        %1288 = vmatpush1.bf16.msra.mxu0 %v1140
        %1289 = vmatprep.subr.bf16.mxu0 0
        %1290 = vmatpush1.bf16.msra.mxu0 %v1141
        %1291 = vmatprep.subr.bf16.mxu0 0
        %1292 = vmatpush1.bf16.msra.mxu0 %v1142
        %1293 = vmatprep.subr.bf16.mxu0 0
        %1294 = vmatpush1.bf16.msra.mxu0 %v1143
        %1295 = vmatprep.subr.bf16.mxu0 0
        %1296 = vmatpush1.bf16.msra.mxu0 0
        %1297 = vmatprep.subr.bf16.mxu0 0
        %1298 = vmatpush1.bf16.msra.mxu0 0
        %1299 = vmatprep.subr.bf16.mxu0 0
        %1300 = vmatpush1.bf16.msra.mxu0 0
        %1301 = vmatprep.subr.bf16.mxu0 0
        %1302 = vmatpush1.bf16.msra.mxu0 0
        %1303 = vmatprep.subr.bf16.mxu0 0
        %1304 = vmatpush1.bf16.msra.mxu0 0
        %1305 = vmatprep.subr.bf16.mxu0 0
        %1306 = vmatpush1.bf16.msra.mxu0 0
        %1307 = vmatprep.subr.bf16.mxu0 0
        %1308 = vmatpush1.bf16.msra.mxu0 0
        %1309 = vmatprep.subr.bf16.mxu0 0
        %1310 = vmatpush1.bf16.msra.mxu0 0
        %1311 = vmatprep.mubr.bf16.mxu0 0
        %1312 = vmatmul.mubr.bf16.gmra.mrb[0].mxu0 %v1278
        %v1313 = vpop.f32.mrb[0].mxu0
        %v1314 = vadd.f32 %v546, %v1313
        %v1315 = vpop.f32.mrb[0].mxu0
        %v1316 = vpop.f32.mrb[0].mxu0
        %v1317 = vpop.f32.mrb[0].mxu0
        %1318 = vdwg.mxu0
        %v1319 = vmax.f32 %v1314, 0.0
        %s1320 = scalar_lea.vmem %s311, 24 [#allocation7]
        %1321 = vst [vmem:[%s1320] sm:$0xff] %v1319
        %s1322 = sand.u32 %s170, 1
        %s1323 = scalar_lea.sflag [#allocation4], %s1322
        %s1324 = sand.u32 %s170, 1
        %s1325 = smul.addr %s1324, 32
        %s1326 = scalar_lea.vmem [#allocation7], %s1325
        // Predicated region
        $region53: #{tpu_custom_call.1} parent=43 // pred_check
          %p1327 = pneg %p180
        $region54: #{tpu_custom_call.1} parent=43 // pred_check_branch
          %1329 = sbr.rel (%p1327) target = $region56
        $region55: #{tpu_custom_call.1} parent=43 // pred_region
          %s1330 = smul.u32 4, %s26
          %s1332 = ssub.s32 512, 512
          %1333 = vsyncadd %s1323, %s1332
          %s1334 = smul.addr %s1330, 128
          %s1335 = scalar_lea.hbm %s6, %s1334
          %s1336 = sshll.u32 %s1326, 4
          %s1337 = int_to_ptr.vmem [resolvable:$true] %s1336
          %1342 = dma.vmem_to_hbm [thread:$0]  %s1337, 512, %s1335, %s1323, 128, 128, 8
        $region56: #{tpu_custom_call.1} parent=43 // pred_fallthru
          _
      $region44: #{tpu_custom_call.1} parent=5 // pred_fallthru
        _
      %p1343 = scmp.le.s32.totalorder 2, %s21
      // Predicated region
      $region57: #{tpu_custom_call.1} parent=5 // pred_check
        %p1344 = pneg %p1343
      $region58: #{tpu_custom_call.1} parent=5 // pred_check_branch
        %1346 = sbr.rel (%p1344) target = $region60
      $region59: #{tpu_custom_call.1} parent=5 // pred_region
        %s1347 = ssub.s32 %s21, 2
        // Predicated region
        $region61: #{tpu_custom_call.1} parent=59 // pred_check
          %p1348 = pneg %p186
        $region62: #{tpu_custom_call.1} parent=59 // pred_check_branch
          %1350 = sbr.rel (%p1348) target = $region64
        $region63: #{tpu_custom_call.1} parent=59 // pred_region
          %s1351 = sand.u32 %s171, 1
          %s1352 = scalar_lea.sflag [#allocation4], %s1351
          %s1353 = sand.u32 %s171, 1
          %s1354 = smul.addr %s1353, 32
          %s1355 = scalar_lea.vmem [#allocation7], %s1354
          %1356 = dma.done %s1352, 512
        $region64: #{tpu_custom_call.1} parent=59 // pred_fallthru
          _
      $region60: #{tpu_custom_call.1} parent=5 // pred_fallthru
        _
    $region6: #{tpu_custom_call.1} parent=1 // loop_footer
      %s25 = sadd.s32 1, %s21
    $region7: #{tpu_custom_call.1} parent=1 // loop_footer_branch
      %20 = sbr.rel target = $region3
    $region8: #{tpu_custom_call.1} parent=1 // loop_exit
      _
    %1357 = vsyncpa [#allocation3], 1
    %s1358 = scalar_lea.sflag [#allocation3], 1
    %1359 = vsyncpa %s1358, 1
    %1360 = vsyncpa [#allocation6], 1
    %s1361 = scalar_lea.sflag [#allocation6], 1
    %1362 = vsyncpa %s1361, 1
    %1363 = vsyncpa [#allocation4], 1
    %s1364 = scalar_lea.sflag [#allocation4], 1
    %1365 = vsyncpa %s1364, 1

</llo_original>
